<compile_context>
chip_gen: v7x
topology: tpu7x:2x2x1
jax: 0.10.0
libtpu: 0.0.40
codegen_flags: <defaults>
</compile_context>

<pallas_src>
import jax
import jax.numpy as jnp
from jax.experimental import pallas as pl
from jax.experimental.pallas import tpu as pltpu

EPS = 1e-5
MXU_DTYPE = jnp.bfloat16   # conv operand dtype on the MXU (f32 accumulation, f32 BN)


# ----------------------------------------------------------------------------------
# Kernel
# ----------------------------------------------------------------------------------
def _make_kernel(N, H, num_pixels, mxu_dtype):
    NH = N * H
    inv_count = 1.0 / float(num_pixels)

    def kernel(x_ref, b1_ref, b2_ref, same_ch_ref,
               g1_ref, be1_ref, g2_ref, be2_ref, out_ref):
        same_ch = same_ch_ref[...]                       # (W*P, W*P) f32, 1 iff same channel

        # Per-image edge masks for the height halo (realise the height zero-padding and
        # block cross-image bleed).  Computed once, reused by both convs.
        row = jax.lax.broadcasted_iota(jnp.int32, (NH, 1), 0)
        h_in_img = row % H
        not_top = (h_in_img != 0).astype(jnp.float32)        # (NH, 1)
        not_bot = (h_in_img != (H - 1)).astype(jnp.float32)  # (NH, 1)

        def conv3x3(a, b_ref):
            """a: (N*H, W*Ci) f32 activations; b_ref: (3, W*Ci, W*Co) banded weights."""
            # Halo rows via XLU sublane roll + edge mask (no MXU shift operators).
            up = pltpu.roll(a, 1, axis=0) * not_top          # up[r] = a[r-1], 0 at image top
            dn = pltpu.roll(a, NH - 1, axis=0) * not_bot     # dn[r] = a[r+1], 0 at image bottom
            # 3 accumulated MXU matmuls (K = W*Ci), uninterrupted f32 accumulation chain.
            o = jnp.dot(up.astype(mxu_dtype), b_ref[0], preferred_element_type=jnp.float32)
            o = o + jnp.dot(a.astype(mxu_dtype), b_ref[1], preferred_element_type=jnp.float32)
            o = o + jnp.dot(dn.astype(mxu_dtype), b_ref[2], preferred_element_type=jnp.float32)
            return o                                          # (N*H, W*Co) f32

        def bn_relu(o, gamma_l, beta_l):
            # Row-sum first (XLU reduce), then fold per channel with a tiny
            # (1, W*P) @ (W*P, W*P) matmul.  Two-pass variance (centered) for stability.
            s = jnp.sum(o, axis=0, keepdims=True)                                  # (1, W*P)
            mean_l = jnp.dot(s, same_ch, preferred_element_type=jnp.float32) * inv_count
            c = o - mean_l
            s2 = jnp.sum(c * c, axis=0, keepdims=True)                             # (1, W*P)
            var_l = jnp.dot(s2, same_ch, preferred_element_type=jnp.float32) * inv_count
            scale_l = gamma_l * jax.lax.rsqrt(var_l + EPS)
            return jnp.maximum(c * scale_l + beta_l, 0.0)

        x = x_ref[...].astype(jnp.float32)
        y = bn_relu(conv3x3(x, b1_ref), g1_ref[...], be1_ref[...])
        z = bn_relu(conv3x3(y, b2_ref), g2_ref[...], be2_ref[...])
        out_ref[...] = z.astype(out_ref.dtype)               # lane-dense (N*H, W*P) store

    return kernel


# ----------------------------------------------------------------------------------
# Host-side constant construction (built once per block in make_basic_block)
# ----------------------------------------------------------------------------------
def _banded_weights(w_hwio, W):
    """w_hwio: (3, 3, Ci, Co) -> (3, W*Ci, W*Co) block-banded matrices (one per kernel row).

    B[kh][(ow + kw - 1)*Ci + ci, ow*Co + co] = w[kh, kw, ci, co]; entries where
    ow + kw - 1 falls outside [0, W) are zero -- this realises the width zero-padding.
    """
    mats = []
    for kh in range(3):
        b = None
        for kw in range(3):
            shift = jnp.eye(W, k=1 - kw, dtype=w_hwio.dtype)   # ones at (ow + kw - 1, ow)
            term = jnp.kron(shift, w_hwio[kh, kw])
            b = term if b is None else b + term
        mats.append(b)
    return jnp.stack(mats, axis=0)


def make_basic_block(params, N, Cin, H, W, mxu_dtype=MXU_DTYPE, out_dtype=jnp.float32):
    """Build a jitted forward: (N, Cin, H, W) -> (N, planes, H, W). stride=1, pad=1, 3x3."""
    w1, g1, b1, w2, g2, b2 = params
    P = w1.shape[-1]

    # Pad Cin so conv1's K = W*Cin reaches a multiple of 128 (full lanes / full MXU K)
    # whenever the padding is expressible as whole channels; otherwise leave as-is.
    wcin = W * Cin
    target = -(-wcin // 128) * 128
    cin_pad = Cin + (target - wcin) // W if (target - wcin) % W == 0 else Cin

    w1p = jnp.pad(w1, ((0, 0), (0, 0), (0, cin_pad - Cin), (0, 0)))
    bw1 = _banded_weights(w1p.astype(jnp.float32), W).astype(mxu_dtype)   # (3, W*cin_pad, W*P)
    bw2 = _banded_weights(w2.astype(jnp.float32), W).astype(mxu_dtype)    # (3, W*P,       W*P)

    lane_ch = jnp.arange(W * P) % P                                       # lane = w*P + c
    same_ch = (lane_ch[:, None] == lane_ch[None, :]).astype(jnp.float32)  # (W*P, W*P)

    def tile_lane(v):                                                     # (P,) -> (1, W*P)
        return jnp.tile(v.astype(jnp.float32), W).reshape(1, W * P)

    g1_l, b1_l = tile_lane(g1), tile_lane(b1)
    g2_l, b2_l = tile_lane(g2), tile_lane(b2)

    kernel = _make_kernel(N, H, N * H * W, mxu_dtype)
    call = pl.pallas_call(
        kernel,
        out_shape=jax.ShapeDtypeStruct((N * H, W * P), out_dtype),
        in_specs=[pl.BlockSpec(memory_space=pltpu.MemorySpace.VMEM)] * 8,
        out_specs=pl.BlockSpec(memory_space=pltpu.MemorySpace.VMEM),
        compiler_params=pltpu.CompilerParams(vmem_limit_bytes=32 * 1024 * 1024),
    )

    @jax.jit
    def forward(x_nchw):
        # Fold to the lane-dense layout: rows = (n, h), lanes = (w, c).
        x = jnp.transpose(x_nchw, (0, 2, 3, 1)).astype(jnp.float32)      # NHWC
        if cin_pad != Cin:
            x = jnp.pad(x, ((0, 0), (0, 0), (0, 0), (0, cin_pad - Cin)))
        x_f = x.reshape(N * H, W * cin_pad)
        out_f = call(x_f, bw1, bw2, same_ch, g1_l, b1_l, g2_l, b2_l)
        return jnp.transpose(out_f.reshape(N, H, W, P), (0, 3, 1, 2))    # back to NCHW

    return forward


# ----------------------------------------------------------------------------------
# Pure-JAX reference (module semantics, f32)
# ----------------------------------------------------------------------------------
def _ref_forward(x_nchw, params):
    w1, g1, b1, w2, g2, b2 = params
    x = jnp.transpose(x_nchw, (0, 2, 3, 1)).astype(jnp.float32)
    dn = ('NHWC', 'HWIO', 'NHWC')

    def conv(v, w):
        return jax.lax.conv_general_dilated(v, w, (1, 1), ((1, 1), (1, 1)),
                                            dimension_numbers=dn,
                                            precision=jax.lax.Precision.HIGHEST)

    def bn(y, g, b):
        mean = jnp.mean(y, axis=(0, 1, 2), keepdims=True)
        var = jnp.mean((y - mean) ** 2, axis=(0, 1, 2), keepdims=True)
        return (y - mean) * jax.lax.rsqrt(var + EPS) * g + b

    y = jax.nn.relu(bn(conv(x, w1), g1, b1))
    z = jax.nn.relu(bn(conv(y, w2), g2, b2))
    return jnp.transpose(z, (0, 3, 1, 2))


if __name__ == "__main__":
    # Small shapes consistent with the module: BasicBlock(in_planes=4, planes=8, stride=1)
    N, Cin, H, W = 2, 4, 16, 16
    planes = 8

    key = jax.random.PRNGKey(0)
    k_x, k_w1, k_w2, k_g1, k_b1, k_g2, k_b2 = jax.random.split(key, 7)

    x = jax.random.normal(k_x, (N, Cin, H, W), dtype=jnp.float32)
    w1 = jax.random.normal(k_w1, (3, 3, Cin, planes), jnp.float32) * (2.0 / (9 * Cin)) ** 0.5
    w2 = jax.random.normal(k_w2, (3, 3, planes, planes), jnp.float32) * (2.0 / (9 * planes)) ** 0.5
    # Non-trivial affine BN params to exercise the scale/shift path.
    g1 = 1.0 + 0.2 * jax.random.normal(k_g1, (planes,), jnp.float32)
    b1 = 0.2 * jax.random.normal(k_b1, (planes,), jnp.float32)
    g2 = 1.0 + 0.2 * jax.random.normal(k_g2, (planes,), jnp.float32)
    b2 = 0.2 * jax.random.normal(k_b2, (planes,), jnp.float32)
    params = (w1, g1, b1, w2, g2, b2)

    ref = jax.block_until_ready(_ref_forward(x, params))

    # (1) f32 MXU operands, f32 output: validates the algorithm (banded matmuls,
    #     roll+mask halo, two-pass BN) tightly against the pure-JAX reference.
    fwd_f32 = make_basic_block(params, N, Cin, H, W,
                               mxu_dtype=jnp.float32, out_dtype=jnp.float32)
    out_f32 = jax.block_until_ready(fwd_f32(x))
    assert out_f32.shape == (N, planes, H, W)
    assert jnp.allclose(out_f32, ref, rtol=1e-3, atol=2e-3), \
        "f32 Pallas output mismatch vs JAX reference"

    # (2) Production-leaning path: bf16 MXU operands (f32 accumulation, f32 BN) and
    #     bf16 lane-dense output; tolerance loosened for bf16 rounding only.
    fwd_bf16 = make_basic_block(params, N, Cin, H, W,
                                mxu_dtype=jnp.bfloat16, out_dtype=jnp.bfloat16)
    out_bf16 = jax.block_until_ready(fwd_bf16(x))
    assert out_bf16.shape == (N, planes, H, W)
    assert jnp.allclose(out_bf16.astype(jnp.float32), ref, rtol=3e-2, atol=6e-2), \
        "bf16 Pallas output mismatch vs JAX reference"

    print("KERNEL_OK")
</pallas_src>

<mosaic_0001>
module attributes {stable_mosaic.version = 11 : i64} {
  func.func @kernel(%arg0: memref<32x128xf32, #tpu.memory_space<vmem>>, %arg1: memref<3x128x128xf32, #tpu.memory_space<vmem>>, %arg2: memref<3x128x128xf32, #tpu.memory_space<vmem>>, %arg3: memref<128x128xf32, #tpu.memory_space<vmem>>, %arg4: memref<1x128xf32, #tpu.memory_space<vmem>>, %arg5: memref<1x128xf32, #tpu.memory_space<vmem>>, %arg6: memref<1x128xf32, #tpu.memory_space<vmem>>, %arg7: memref<1x128xf32, #tpu.memory_space<vmem>>, %arg8: memref<32x128xf32, #tpu.memory_space<vmem>>) attributes {dimension_semantics = [], scalar_prefetch = 0 : i64, scratch_operands = 0 : i64, tpu.core_type = #tpu.core_type<tc>} {
    %c0 = arith.constant 0 : index
    %c0_0 = arith.constant 0 : index
    %0 = vector.load %arg3[%c0, %c0_0] : memref<128x128xf32, #tpu.memory_space<vmem>>, vector<128x128xf32>
    %1 = tpu.iota {dimensions = array<i32: 0>} : vector<32x1xi32>
    %c16_i32 = arith.constant 16 : i32
    %c0_i32 = arith.constant 0 : i32
    %2 = arith.cmpi eq, %c16_i32, %c0_i32 : i32
    %c1_i32 = arith.constant 1 : i32
    %3 = arith.select %2, %c1_i32, %c16_i32 : i32
    %4 = vector.broadcast %3 : i32 to vector<32x1xi32>
    %5 = arith.remsi %1, %4 : vector<32x1xi32>
    %c0_i32_1 = arith.constant 0 : i32
    %6 = vector.broadcast %c0_i32_1 : i32 to vector<32x1xi32>
    %7 = arith.cmpi ne, %5, %6 : vector<32x1xi32>
    %c0_i32_2 = arith.constant 0 : i32
    %8 = vector.broadcast %c0_i32_2 : i32 to vector<32x1xi32>
    %9 = arith.cmpi slt, %5, %8 : vector<32x1xi32>
    %c0_i32_3 = arith.constant 0 : i32
    %10 = arith.cmpi slt, %3, %c0_i32_3 : i32
    %11 = vector.broadcast %10 : i1 to vector<32x1xi1>
    %12 = vector.broadcast %11 : vector<32x1xi1> to vector<32x1xi1>
    %13 = arith.xori %9, %12 : vector<32x1xi1>
    %14 = arith.andi %13, %7 : vector<32x1xi1>
    %15 = vector.broadcast %3 : i32 to vector<32x1xi32>
    %16 = arith.addi %5, %15 : vector<32x1xi32>
    %17 = arith.select %14, %16, %5 : vector<32x1xi1>, vector<32x1xi32>
    %c0_i32_4 = arith.constant 0 : i32
    %18 = vector.broadcast %c0_i32_4 : i32 to vector<32x1xi32>
    %19 = arith.cmpi ne, %17, %18 : vector<32x1xi32>
    %20 = arith.extui %19 : vector<32x1xi1> to vector<32x1xi32>
    %21 = arith.sitofp %20 : vector<32x1xi32> to vector<32x1xf32>
    %c15_i32 = arith.constant 15 : i32
    %22 = vector.broadcast %c15_i32 : i32 to vector<32x1xi32>
    %23 = arith.cmpi ne, %17, %22 : vector<32x1xi32>
    %24 = arith.extui %23 : vector<32x1xi1> to vector<32x1xi32>
    %25 = arith.sitofp %24 : vector<32x1xi32> to vector<32x1xf32>
    %c0_5 = arith.constant 0 : index
    %c0_6 = arith.constant 0 : index
    %26 = vector.load %arg0[%c0_5, %c0_6] : memref<32x128xf32, #tpu.memory_space<vmem>>, vector<32x128xf32>
    %c1_i32_7 = arith.constant 1 : i32
    %27 = tpu.dynamic_rotate %26 by %c1_i32_7 dim 0 : vector<32x128xf32>, i32 -> vector<32x128xf32>
    %28 = vector.broadcast %21 : vector<32x1xf32> to vector<32x128xf32>
    %29 = arith.mulf %27, %28 : vector<32x128xf32>
    %c31_i32 = arith.constant 31 : i32
    %30 = tpu.dynamic_rotate %26 by %c31_i32 dim 0 : vector<32x128xf32>, i32 -> vector<32x128xf32>
    %31 = vector.broadcast %25 : vector<32x1xf32> to vector<32x128xf32>
    %32 = arith.mulf %30, %31 : vector<32x128xf32>
    %c0_8 = arith.constant 0 : index
    %c0_9 = arith.constant 0 : index
    %c0_10 = arith.constant 0 : index
    %33 = vector.load %arg1[%c0_8, %c0_9, %c0_10] : memref<3x128x128xf32, #tpu.memory_space<vmem>>, vector<1x128x128xf32>
    %34 = vector.shape_cast %33 : vector<1x128x128xf32> to vector<128x128xf32>
    %cst = arith.constant dense<0.000000e+00> : vector<32x128xf32>
    %35 = tpu.matmul %29, %34, %cst {dimension_numbers = #tpu.dot_dimension_numbers<[1], [0], [0], [1], [0, 0, 1, 1], [], []>} : vector<32x128xf32>, vector<128x128xf32>, vector<32x128xf32> -> vector<32x128xf32>
    %c1 = arith.constant 1 : index
    %c0_11 = arith.constant 0 : index
    %c0_12 = arith.constant 0 : index
    %36 = vector.load %arg1[%c1, %c0_11, %c0_12] : memref<3x128x128xf32, #tpu.memory_space<vmem>>, vector<1x128x128xf32>
    %37 = vector.shape_cast %36 : vector<1x128x128xf32> to vector<128x128xf32>
    %cst_13 = arith.constant dense<0.000000e+00> : vector<32x128xf32>
    %38 = tpu.matmul %26, %37, %cst_13 {dimension_numbers = #tpu.dot_dimension_numbers<[1], [0], [0], [1], [0, 0, 1, 1], [], []>} : vector<32x128xf32>, vector<128x128xf32>, vector<32x128xf32> -> vector<32x128xf32>
    %39 = arith.addf %35, %38 : vector<32x128xf32>
    %c2 = arith.constant 2 : index
    %c0_14 = arith.constant 0 : index
    %c0_15 = arith.constant 0 : index
    %40 = vector.load %arg1[%c2, %c0_14, %c0_15] : memref<3x128x128xf32, #tpu.memory_space<vmem>>, vector<1x128x128xf32>
    %41 = vector.shape_cast %40 : vector<1x128x128xf32> to vector<128x128xf32>
    %cst_16 = arith.constant dense<0.000000e+00> : vector<32x128xf32>
    %42 = tpu.matmul %32, %41, %cst_16 {dimension_numbers = #tpu.dot_dimension_numbers<[1], [0], [0], [1], [0, 0, 1, 1], [], []>} : vector<32x128xf32>, vector<128x128xf32>, vector<32x128xf32> -> vector<32x128xf32>
    %43 = arith.addf %39, %42 : vector<32x128xf32>
    %c0_17 = arith.constant 0 : index
    %c0_18 = arith.constant 0 : index
    %44 = vector.load %arg4[%c0_17, %c0_18] : memref<1x128xf32, #tpu.memory_space<vmem>>, vector<1x128xf32>
    %c0_19 = arith.constant 0 : index
    %c0_20 = arith.constant 0 : index
    %45 = vector.load %arg5[%c0_19, %c0_20] : memref<1x128xf32, #tpu.memory_space<vmem>>, vector<1x128xf32>
    %cst_21 = arith.constant dense<0.000000e+00> : vector<128xf32>
    %46 = vector.multi_reduction <add>, %43, %cst_21 [0] : vector<32x128xf32> to vector<128xf32>
    %47 = vector.shape_cast %46 : vector<128xf32> to vector<1x128xf32>
    %cst_22 = arith.constant dense<0.000000e+00> : vector<1x128xf32>
    %48 = tpu.matmul %47, %0, %cst_22 {dimension_numbers = #tpu.dot_dimension_numbers<[1], [0], [0], [1], [0, 0, 1, 1], [], []>} : vector<1x128xf32>, vector<128x128xf32>, vector<1x128xf32> -> vector<1x128xf32>
    %cst_23 = arith.constant 0.001953125 : f32
    %49 = vector.broadcast %cst_23 : f32 to vector<1x128xf32>
    %50 = arith.mulf %48, %49 : vector<1x128xf32>
    %51 = vector.broadcast %50 : vector<1x128xf32> to vector<32x128xf32>
    %52 = arith.subf %43, %51 : vector<32x128xf32>
    %53 = arith.mulf %52, %52 : vector<32x128xf32>
    %cst_24 = arith.constant dense<0.000000e+00> : vector<128xf32>
    %54 = vector.multi_reduction <add>, %53, %cst_24 [0] : vector<32x128xf32> to vector<128xf32>
    %55 = vector.shape_cast %54 : vector<128xf32> to vector<1x128xf32>
    %cst_25 = arith.constant dense<0.000000e+00> : vector<1x128xf32>
    %56 = tpu.matmul %55, %0, %cst_25 {dimension_numbers = #tpu.dot_dimension_numbers<[1], [0], [0], [1], [0, 0, 1, 1], [], []>} : vector<1x128xf32>, vector<128x128xf32>, vector<1x128xf32> -> vector<1x128xf32>
    %cst_26 = arith.constant 0.001953125 : f32
    %57 = vector.broadcast %cst_26 : f32 to vector<1x128xf32>
    %58 = arith.mulf %56, %57 : vector<1x128xf32>
    %cst_27 = arith.constant 9.99999974E-6 : f32
    %59 = vector.broadcast %cst_27 : f32 to vector<1x128xf32>
    %60 = arith.addf %58, %59 : vector<1x128xf32>
    %61 = math.rsqrt %60 : vector<1x128xf32>
    %62 = arith.mulf %44, %61 : vector<1x128xf32>
    %63 = vector.broadcast %62 : vector<1x128xf32> to vector<32x128xf32>
    %64 = arith.mulf %52, %63 : vector<32x128xf32>
    %65 = vector.broadcast %45 : vector<1x128xf32> to vector<32x128xf32>
    %66 = arith.addf %64, %65 : vector<32x128xf32>
    %cst_28 = arith.constant 0.000000e+00 : f32
    %67 = vector.broadcast %cst_28 : f32 to vector<32x128xf32>
    %68 = arith.maximumf %66, %67 : vector<32x128xf32>
    %c1_i32_29 = arith.constant 1 : i32
    %69 = tpu.dynamic_rotate %68 by %c1_i32_29 dim 0 : vector<32x128xf32>, i32 -> vector<32x128xf32>
    %70 = vector.broadcast %21 : vector<32x1xf32> to vector<32x128xf32>
    %71 = arith.mulf %69, %70 : vector<32x128xf32>
    %c31_i32_30 = arith.constant 31 : i32
    %72 = tpu.dynamic_rotate %68 by %c31_i32_30 dim 0 : vector<32x128xf32>, i32 -> vector<32x128xf32>
    %73 = vector.broadcast %25 : vector<32x1xf32> to vector<32x128xf32>
    %74 = arith.mulf %72, %73 : vector<32x128xf32>
    %c0_31 = arith.constant 0 : index
    %c0_32 = arith.constant 0 : index
    %c0_33 = arith.constant 0 : index
    %75 = vector.load %arg2[%c0_31, %c0_32, %c0_33] : memref<3x128x128xf32, #tpu.memory_space<vmem>>, vector<1x128x128xf32>
    %76 = vector.shape_cast %75 : vector<1x128x128xf32> to vector<128x128xf32>
    %cst_34 = arith.constant dense<0.000000e+00> : vector<32x128xf32>
    %77 = tpu.matmul %71, %76, %cst_34 {dimension_numbers = #tpu.dot_dimension_numbers<[1], [0], [0], [1], [0, 0, 1, 1], [], []>} : vector<32x128xf32>, vector<128x128xf32>, vector<32x128xf32> -> vector<32x128xf32>
    %c1_35 = arith.constant 1 : index
    %c0_36 = arith.constant 0 : index
    %c0_37 = arith.constant 0 : index
    %78 = vector.load %arg2[%c1_35, %c0_36, %c0_37] : memref<3x128x128xf32, #tpu.memory_space<vmem>>, vector<1x128x128xf32>
    %79 = vector.shape_cast %78 : vector<1x128x128xf32> to vector<128x128xf32>
    %cst_38 = arith.constant dense<0.000000e+00> : vector<32x128xf32>
    %80 = tpu.matmul %68, %79, %cst_38 {dimension_numbers = #tpu.dot_dimension_numbers<[1], [0], [0], [1], [0, 0, 1, 1], [], []>} : vector<32x128xf32>, vector<128x128xf32>, vector<32x128xf32> -> vector<32x128xf32>
    %81 = arith.addf %77, %80 : vector<32x128xf32>
    %c2_39 = arith.constant 2 : index
    %c0_40 = arith.constant 0 : index
    %c0_41 = arith.constant 0 : index
    %82 = vector.load %arg2[%c2_39, %c0_40, %c0_41] : memref<3x128x128xf32, #tpu.memory_space<vmem>>, vector<1x128x128xf32>
    %83 = vector.shape_cast %82 : vector<1x128x128xf32> to vector<128x128xf32>
    %cst_42 = arith.constant dense<0.000000e+00> : vector<32x128xf32>
    %84 = tpu.matmul %74, %83, %cst_42 {dimension_numbers = #tpu.dot_dimension_numbers<[1], [0], [0], [1], [0, 0, 1, 1], [], []>} : vector<32x128xf32>, vector<128x128xf32>, vector<32x128xf32> -> vector<32x128xf32>
    %85 = arith.addf %81, %84 : vector<32x128xf32>
    %c0_43 = arith.constant 0 : index
    %c0_44 = arith.constant 0 : index
    %86 = vector.load %arg6[%c0_43, %c0_44] : memref<1x128xf32, #tpu.memory_space<vmem>>, vector<1x128xf32>
    %c0_45 = arith.constant 0 : index
    %c0_46 = arith.constant 0 : index
    %87 = vector.load %arg7[%c0_45, %c0_46] : memref<1x128xf32, #tpu.memory_space<vmem>>, vector<1x128xf32>
    %cst_47 = arith.constant dense<0.000000e+00> : vector<128xf32>
    %88 = vector.multi_reduction <add>, %85, %cst_47 [0] : vector<32x128xf32> to vector<128xf32>
    %89 = vector.shape_cast %88 : vector<128xf32> to vector<1x128xf32>
    %cst_48 = arith.constant dense<0.000000e+00> : vector<1x128xf32>
    %90 = tpu.matmul %89, %0, %cst_48 {dimension_numbers = #tpu.dot_dimension_numbers<[1], [0], [0], [1], [0, 0, 1, 1], [], []>} : vector<1x128xf32>, vector<128x128xf32>, vector<1x128xf32> -> vector<1x128xf32>
    %cst_49 = arith.constant 0.001953125 : f32
    %91 = vector.broadcast %cst_49 : f32 to vector<1x128xf32>
    %92 = arith.mulf %90, %91 : vector<1x128xf32>
    %93 = vector.broadcast %92 : vector<1x128xf32> to vector<32x128xf32>
    %94 = arith.subf %85, %93 : vector<32x128xf32>
    %95 = arith.mulf %94, %94 : vector<32x128xf32>
    %cst_50 = arith.constant dense<0.000000e+00> : vector<128xf32>
    %96 = vector.multi_reduction <add>, %95, %cst_50 [0] : vector<32x128xf32> to vector<128xf32>
    %97 = vector.shape_cast %96 : vector<128xf32> to vector<1x128xf32>
    %cst_51 = arith.constant dense<0.000000e+00> : vector<1x128xf32>
    %98 = tpu.matmul %97, %0, %cst_51 {dimension_numbers = #tpu.dot_dimension_numbers<[1], [0], [0], [1], [0, 0, 1, 1], [], []>} : vector<1x128xf32>, vector<128x128xf32>, vector<1x128xf32> -> vector<1x128xf32>
    %cst_52 = arith.constant 0.001953125 : f32
    %99 = vector.broadcast %cst_52 : f32 to vector<1x128xf32>
    %100 = arith.mulf %98, %99 : vector<1x128xf32>
    %cst_53 = arith.constant 9.99999974E-6 : f32
    %101 = vector.broadcast %cst_53 : f32 to vector<1x128xf32>
    %102 = arith.addf %100, %101 : vector<1x128xf32>
    %103 = math.rsqrt %102 : vector<1x128xf32>
    %104 = arith.mulf %86, %103 : vector<1x128xf32>
    %105 = vector.broadcast %104 : vector<1x128xf32> to vector<32x128xf32>
    %106 = arith.mulf %94, %105 : vector<32x128xf32>
    %107 = vector.broadcast %87 : vector<1x128xf32> to vector<32x128xf32>
    %108 = arith.addf %106, %107 : vector<32x128xf32>
    %cst_54 = arith.constant 0.000000e+00 : f32
    %109 = vector.broadcast %cst_54 : f32 to vector<32x128xf32>
    %110 = arith.maximumf %108, %109 : vector<32x128xf32>
    %c0_55 = arith.constant 0 : index
    %c0_56 = arith.constant 0 : index
    %111 = vector.load %arg8[%c0_55, %c0_56] : memref<32x128xf32, #tpu.memory_space<vmem>>, vector<32x128xf32>
    tpu.vector_store %arg8[%c0_55, %c0_56], %110 {strides = array<i32>} : memref<32x128xf32, #tpu.memory_space<vmem>>, vector<32x128xf32>,
    return
  }
}

</mosaic_0001>

<llo_original>
// kernel: forward.1
$region0: #{forward.1}
  #allocation0 [shape = 'u32[]', space=smem, size = 0x4, offset = 0x4, fixed_abs, tag = 'smem constant byte address 0x4 - core index']
  #allocation1 [shape = 'u32[144,128]{1,0:T(1,128)}', space=vmem, size = 0x12000, scoped, tag = 'internal scratch']
  %s0 = inlined_call_operand.vmem [shape: f32[32,128], index: 0, kind: input, shape index: {}]
  %s1 = inlined_call_operand.vmem [shape: f32[3,128,128], index: 1, kind: input, shape index: {}]
  %s2 = inlined_call_operand.vmem [shape: f32[3,128,128], index: 2, kind: input, shape index: {}]
  %s3 = inlined_call_operand.vmem [shape: f32[128,128], index: 3, kind: input, shape index: {}]
  %s4 = inlined_call_operand.vmem [shape: f32[1,128], index: 4, kind: input, shape index: {}]
  %s5 = inlined_call_operand.vmem [shape: f32[1,128], index: 5, kind: input, shape index: {}]
  %s6 = inlined_call_operand.vmem [shape: f32[1,128], index: 6, kind: input, shape index: {}]
  %s7 = inlined_call_operand.vmem [shape: f32[1,128], index: 7, kind: input, shape index: {}]
  %s8 = inlined_call_operand.vmem [shape: f32[32,128], index: 8, kind: output, shape index: {}]
  %s9 = sld [smem:[#allocation0]]
  $region42: #{forward.1} parent=0
    _
  %s11 = ssub.s32 1, %s9
  %s12 = scalar_select 0, %s11, %s9
  // Predicated region
  $region2: #{forward.1} parent=0 // pred_check
    _
  $region3: #{forward.1} parent=0 // pred_check_branch
    %14 = sbr.rel (0) target = $region5
  $region4: #{forward.1} parent=0 // pred_region
    _
  $region5: #{forward.1} parent=0 // pred_fallthru
    _
  // Predicated region
  $region6: #{forward.1} parent=0 // pred_check
    _
  $region7: #{forward.1} parent=0 // pred_check_branch
    %16 = sbr.rel (0) target = $region9
  $region8: #{forward.1} parent=0 // pred_region
    _
  $region9: #{forward.1} parent=0 // pred_fallthru
    _
  // Predicated region
  $region10: #{forward.1} parent=0 // pred_check
    _
  $region11: #{forward.1} parent=0 // pred_check_branch
    %18 = sbr.rel (0) target = $region13
  $region12: #{forward.1} parent=0 // pred_region
    _
  $region13: #{forward.1} parent=0 // pred_fallthru
    _
  // Predicated region
  $region14: #{forward.1} parent=0 // pred_check
    _
  $region15: #{forward.1} parent=0 // pred_check_branch
    %20 = sbr.rel (0) target = $region17
  $region16: #{forward.1} parent=0 // pred_region
    _
  $region17: #{forward.1} parent=0 // pred_fallthru
    _
  // Predicated region
  $region18: #{forward.1} parent=0 // pred_check
    _
  $region19: #{forward.1} parent=0 // pred_check_branch
    %22 = sbr.rel (0) target = $region21
  $region20: #{forward.1} parent=0 // pred_region
    _
  $region21: #{forward.1} parent=0 // pred_fallthru
    _
  // Predicated region
  $region22: #{forward.1} parent=0 // pred_check
    _
  $region23: #{forward.1} parent=0 // pred_check_branch
    %24 = sbr.rel (0) target = $region25
  $region24: #{forward.1} parent=0 // pred_region
    _
  $region25: #{forward.1} parent=0 // pred_fallthru
    _
  // Predicated region
  $region26: #{forward.1} parent=0 // pred_check
    _
  $region27: #{forward.1} parent=0 // pred_check_branch
    %26 = sbr.rel (0) target = $region29
  $region28: #{forward.1} parent=0 // pred_region
    _
  $region29: #{forward.1} parent=0 // pred_fallthru
    _
  // Predicated region
  $region30: #{forward.1} parent=0 // pred_check
    _
  $region31: #{forward.1} parent=0 // pred_check_branch
    %28 = sbr.rel (0) target = $region33
  $region32: #{forward.1} parent=0 // pred_region
    _
  $region33: #{forward.1} parent=0 // pred_fallthru
    _
  %v29 = vld [vmem:[%s3] sm:$0xff]
  %v30 = vld [vmem:[%s3 + $0x8] sm:$0xff]
  %v31 = vld [vmem:[%s3 + $0x10] sm:$0xff]
  %v32 = vld [vmem:[%s3 + $0x18] sm:$0xff]
  %v33 = vld [vmem:[%s3 + $0x20] sm:$0xff]
  %v34 = vld [vmem:[%s3 + $0x28] sm:$0xff]
  %v35 = vld [vmem:[%s3 + $0x30] sm:$0xff]
  %v36 = vld [vmem:[%s3 + $0x38] sm:$0xff]
  %v37 = vld [vmem:[%s3 + $0x40] sm:$0xff]
  %v38 = vld [vmem:[%s3 + $0x48] sm:$0xff]
  %v39 = vld [vmem:[%s3 + $0x50] sm:$0xff]
  %v40 = vld [vmem:[%s3 + $0x58] sm:$0xff]
  %v41 = vld [vmem:[%s3 + $0x60] sm:$0xff]
  %v42 = vld [vmem:[%s3 + $0x68] sm:$0xff]
  %v43 = vld [vmem:[%s3 + $0x70] sm:$0xff]
  %v44 = vld [vmem:[%s3 + $0x78] sm:$0xff]
  %v45 = vlaneseq
  %v46 = vshrl.u32 %v45, 7
  %v47 = vadd.s32 %v46, 8
  %v48 = vadd.s32 %v46, 16
  %v49 = vadd.s32 %v46, 24
  %vm50 = vcmp.lt.s32.totalorder %v46, 0
  %v51 = vsub.s32 0, %v46
  %v52 = vsel %vm50, %v51, %v46
  %v53 = vshrl.u32 %v52, 4
  %v54 = vand.u32 %v52, 15
  %v55 = vsub.s32 0, %v54
  %v56 = vsel %vm50, %v55, %v54
  %vm57 = vcmp.lt.s32.totalorder %v47, 0
  %v58 = vsub.s32 0, %v47
  %v59 = vsel %vm57, %v58, %v47
  %v60 = vshrl.u32 %v59, 4
  %v61 = vand.u32 %v59, 15
  %v62 = vsub.s32 0, %v61
  %v63 = vsel %vm57, %v62, %v61
  %vm64 = vcmp.lt.s32.totalorder %v48, 0
  %v65 = vsub.s32 0, %v48
  %v66 = vsel %vm64, %v65, %v48
  %v67 = vshrl.u32 %v66, 4
  %v68 = vand.u32 %v66, 15
  %v69 = vsub.s32 0, %v68
  %v70 = vsel %vm64, %v69, %v68
  %vm71 = vcmp.lt.s32.totalorder %v49, 0
  %v72 = vsub.s32 0, %v49
  %v73 = vsel %vm71, %v72, %v49
  %v74 = vshrl.u32 %v73, 4
  %v75 = vand.u32 %v73, 15
  %v76 = vsub.s32 0, %v75
  %v77 = vsel %vm71, %v76, %v75
  %vm78 = vcmp.ne.s32.totalorder %v56, 0
  %vm79 = vcmp.ne.s32.totalorder %v63, 0
  %vm80 = vcmp.ne.s32.totalorder %v70, 0
  %vm81 = vcmp.ne.s32.totalorder %v77, 0
  %vm82 = vcmp.lt.s32.totalorder %v56, 0
  %vm83 = vcmp.lt.s32.totalorder %v63, 0
  %vm84 = vcmp.lt.s32.totalorder %v70, 0
  %vm85 = vcmp.lt.s32.totalorder %v77, 0
  %vm86 = vmand %vm82, %vm78
  %vm87 = vmand %vm83, %vm79
  %vm88 = vmand %vm84, %vm80
  %vm89 = vmand %vm85, %vm81
  %v90 = vadd.s32 %v56, 16
  %v91 = vadd.s32 %v63, 16
  %v92 = vadd.s32 %v70, 16
  %v93 = vadd.s32 %v77, 16
  %v94 = vsel %vm86, %v90, %v56
  %v95 = vsel %vm87, %v91, %v63
  %v96 = vsel %vm88, %v92, %v70
  %v97 = vsel %vm89, %v93, %v77
  %vm98 = vcmp.ne.s32.totalorder %v94, 0
  %vm99 = vcmp.ne.s32.totalorder %v95, 0
  %vm100 = vcmp.ne.s32.totalorder %v96, 0
  %vm101 = vcmp.ne.s32.totalorder %v97, 0
  %v102 = vsel %vm98, 1, 0
  %v103 = vsel %vm99, 1, 0
  %v104 = vsel %vm100, 1, 0
  %v105 = vsel %vm101, 1, 0
  %v106 = vcvt.s32.f32 %v102
  %v107 = vcvt.s32.f32 %v103
  %v108 = vcvt.s32.f32 %v104
  %v109 = vcvt.s32.f32 %v105
  %vm110 = vcmp.ne.s32.totalorder %v94, 15
  %vm111 = vcmp.ne.s32.totalorder %v95, 15
  %vm112 = vcmp.ne.s32.totalorder %v96, 15
  %vm113 = vcmp.ne.s32.totalorder %v97, 15
  %v114 = vsel %vm110, 1, 0
  %v115 = vsel %vm111, 1, 0
  %v116 = vsel %vm112, 1, 0
  %v117 = vsel %vm113, 1, 0
  %v118 = vcvt.s32.f32 %v114
  %v119 = vcvt.s32.f32 %v115
  %v120 = vcvt.s32.f32 %v116
  %v121 = vcvt.s32.f32 %v117
  %v122 = vld [vmem:[%s0] sm:$0xff]
  %v123 = vld [vmem:[%s0 + $0x8] sm:$0xff]
  %v124 = vld [vmem:[%s0 + $0x10] sm:$0xff]
  %v125 = vld [vmem:[%s0 + $0x18] sm:$0xff]
  %v126 = vrot.slane %v122, 7
  %v127 = vrot.slane %v123, 7
  %v128 = vrot.slane %v124, 7
  %v129 = vrot.slane %v125, 7
  %vm130 = vcmp.lt.s32.totalorder %v46, 1
  %v131 = vsel %vm130, %v128, %v129
  %v132 = vsel %vm130, %v127, %v128
  %v133 = vsel %vm130, %v126, %v127
  %v134 = vsel %vm130, %v129, %v126
  %v135 = vmul.f32 %v134, %v106
  %v136 = vmul.f32 %v133, %v107
  %v137 = vmul.f32 %v132, %v108
  %v138 = vmul.f32 %v131, %v109
  %v139 = vrot.slane %v122, 1
  %v140 = vrot.slane %v123, 1
  %v141 = vrot.slane %v124, 1
  %v142 = vrot.slane %v125, 1
  %vm143 = vcmp.lt.s32.totalorder %v46, 7
  %v144 = vsel %vm143, %v141, %v142
  %v145 = vsel %vm143, %v140, %v141
  %v146 = vsel %vm143, %v139, %v140
  %v147 = vsel %vm143, %v142, %v139
  %v148 = vmul.f32 %v146, %v118
  %v149 = vmul.f32 %v145, %v119
  %v150 = vmul.f32 %v144, %v120
  %v151 = vmul.f32 %v147, %v121
  %v152 = vld [vmem:[%s1] sm:$0xff]
  %v153 = vld [vmem:[%s1 + $0x8] sm:$0xff]
  %v154 = vld [vmem:[%s1 + $0x10] sm:$0xff]
  %v155 = vld [vmem:[%s1 + $0x18] sm:$0xff]
  %v156 = vld [vmem:[%s1 + $0x20] sm:$0xff]
  %v157 = vld [vmem:[%s1 + $0x28] sm:$0xff]
  %v158 = vld [vmem:[%s1 + $0x30] sm:$0xff]
  %v159 = vld [vmem:[%s1 + $0x38] sm:$0xff]
  %v160 = vld [vmem:[%s1 + $0x40] sm:$0xff]
  %v161 = vld [vmem:[%s1 + $0x48] sm:$0xff]
  %v162 = vld [vmem:[%s1 + $0x50] sm:$0xff]
  %v163 = vld [vmem:[%s1 + $0x58] sm:$0xff]
  %v164 = vld [vmem:[%s1 + $0x60] sm:$0xff]
  %v165 = vld [vmem:[%s1 + $0x68] sm:$0xff]
  %v166 = vld [vmem:[%s1 + $0x70] sm:$0xff]
  %v167 = vld [vmem:[%s1 + $0x78] sm:$0xff]
  %s168 = scalar_lea.vmem %s1, 128
  %v169 = vld [vmem:[%s168] sm:$0xff]
  %v170 = vld [vmem:[%s168 + $0x8] sm:$0xff]
  %v171 = vld [vmem:[%s168 + $0x10] sm:$0xff]
  %v172 = vld [vmem:[%s168 + $0x18] sm:$0xff]
  %v173 = vld [vmem:[%s168 + $0x20] sm:$0xff]
  %v174 = vld [vmem:[%s168 + $0x28] sm:$0xff]
  %v175 = vld [vmem:[%s168 + $0x30] sm:$0xff]
  %v176 = vld [vmem:[%s168 + $0x38] sm:$0xff]
  %v177 = vld [vmem:[%s168 + $0x40] sm:$0xff]
  %v178 = vld [vmem:[%s168 + $0x48] sm:$0xff]
  %v179 = vld [vmem:[%s168 + $0x50] sm:$0xff]
  %v180 = vld [vmem:[%s168 + $0x58] sm:$0xff]
  %v181 = vld [vmem:[%s168 + $0x60] sm:$0xff]
  %v182 = vld [vmem:[%s168 + $0x68] sm:$0xff]
  %v183 = vld [vmem:[%s168 + $0x70] sm:$0xff]
  %v184 = vld [vmem:[%s168 + $0x78] sm:$0xff]
  %185 = vmatprep.subr.mxu0 0.0
  %186 = vmatpush1.msra.mxu0 %v169
  %187 = vmatprep.subr.mxu0 0.0
  %188 = vmatpush1.msra.mxu0 %v170
  %189 = vmatprep.subr.mxu0 0.0
  %190 = vmatpush1.msra.mxu0 %v171
  %191 = vmatprep.subr.mxu0 0.0
  %192 = vmatpush1.msra.mxu0 %v172
  %193 = vmatprep.subr.mxu0 0.0
  %194 = vmatpush1.msra.mxu0 %v173
  %195 = vmatprep.subr.mxu0 0.0
  %196 = vmatpush1.msra.mxu0 %v174
  %197 = vmatprep.subr.mxu0 0.0
  %198 = vmatpush1.msra.mxu0 %v175
  %199 = vmatprep.subr.mxu0 0.0
  %200 = vmatpush1.msra.mxu0 %v176
  %201 = vmatprep.subr.mxu0 0.0
  %202 = vmatpush1.msra.mxu0 %v177
  %203 = vmatprep.subr.mxu0 0.0
  %204 = vmatpush1.msra.mxu0 %v178
  %205 = vmatprep.subr.mxu0 0.0
  %206 = vmatpush1.msra.mxu0 %v179
  %207 = vmatprep.subr.mxu0 0.0
  %208 = vmatpush1.msra.mxu0 %v180
  %209 = vmatprep.subr.mxu0 0.0
  %210 = vmatpush1.msra.mxu0 %v181
  %211 = vmatprep.subr.mxu0 0.0
  %212 = vmatpush1.msra.mxu0 %v182
  %213 = vmatprep.subr.mxu0 0.0
  %214 = vmatpush1.msra.mxu0 %v183
  %215 = vmatprep.subr.mxu0 0.0
  %216 = vmatpush1.msra.mxu0 %v184
  %217 = vmatprep.subr.mxu0 0.0
  %218 = vmatpush1.msra.mxu0 0.0
  %219 = vmatprep.subr.mxu0 0.0
  %220 = vmatpush1.msra.mxu0 0.0
  %221 = vmatprep.subr.mxu0 0.0
  %222 = vmatpush1.msra.mxu0 0.0
  %223 = vmatprep.subr.mxu0 0.0
  %224 = vmatpush1.msra.mxu0 0.0
  %225 = vmatprep.subr.mxu0 0.0
  %226 = vmatpush1.msra.mxu0 0.0
  %227 = vmatprep.subr.mxu0 0.0
  %228 = vmatpush1.msra.mxu0 0.0
  %229 = vmatprep.subr.mxu0 0.0
  %230 = vmatpush1.msra.mxu0 0.0
  %231 = vmatprep.subr.mxu0 0.0
  %232 = vmatpush1.msra.mxu0 0.0
  %233 = vmatprep.subr.mxu0 0.0
  %234 = vmatpush1.msra.mxu0 0.0
  %235 = vmatprep.subr.mxu0 0.0
  %236 = vmatpush1.msra.mxu0 0.0
  %237 = vmatprep.subr.mxu0 0.0
  %238 = vmatpush1.msra.mxu0 0.0
  %239 = vmatprep.subr.mxu0 0.0
  %240 = vmatpush1.msra.mxu0 0.0
  %241 = vmatprep.subr.mxu0 0.0
  %242 = vmatpush1.msra.mxu0 0.0
  %243 = vmatprep.subr.mxu0 0.0
  %244 = vmatpush1.msra.mxu0 0.0
  %245 = vmatprep.subr.mxu0 0.0
  %246 = vmatpush1.msra.mxu0 0.0
  %247 = vmatprep.subr.mxu0 0.0
  %248 = vmatpush1.msra.mxu0 0.0
  %249 = vmatprep.mubr.f32.mxu0 0.0
  %250 = vmatmul.mubr.f32.gmra.mrb[0].mxu0 %v122
  %v251 = vpop.f32.mrb[0].mxu0
  %v252 = vadd.f32 0.0, %v251
  %v253 = vpop.f32.mrb[0].mxu0
  %254 = vmatprep.mubr.f32.mxu0 0.0
  %255 = vmatmul.mubr.f32.gmra.mrb[0].mxu0 %v123
  %v256 = vpop.f32.mrb[0].mxu0
  %v257 = vadd.f32 0.0, %v256
  %v258 = vpop.f32.mrb[0].mxu0
  %259 = vmatprep.mubr.f32.mxu0 0.0
  %260 = vmatmul.mubr.f32.gmra.mrb[0].mxu0 %v124
  %v261 = vpop.f32.mrb[0].mxu0
  %v262 = vadd.f32 0.0, %v261
  %v263 = vpop.f32.mrb[0].mxu0
  %264 = vmatprep.mubr.f32.mxu0 0.0
  %265 = vmatmul.mubr.f32.gmra.mrb[0].mxu0 %v125
  %v266 = vpop.f32.mrb[0].mxu0
  %v267 = vadd.f32 0.0, %v266
  %v268 = vpop.f32.mrb[0].mxu0
  %269 = vdwg.mxu0
  %270 = vmatprep.subr.mxu0 0.0
  %271 = vmatpush1.msra.mxu0 %v152
  %272 = vmatprep.subr.mxu0 0.0
  %273 = vmatpush1.msra.mxu0 %v153
  %274 = vmatprep.subr.mxu0 0.0
  %275 = vmatpush1.msra.mxu0 %v154
  %276 = vmatprep.subr.mxu0 0.0
  %277 = vmatpush1.msra.mxu0 %v155
  %278 = vmatprep.subr.mxu0 0.0
  %279 = vmatpush1.msra.mxu0 %v156
  %280 = vmatprep.subr.mxu0 0.0
  %281 = vmatpush1.msra.mxu0 %v157
  %282 = vmatprep.subr.mxu0 0.0
  %283 = vmatpush1.msra.mxu0 %v158
  %284 = vmatprep.subr.mxu0 0.0
  %285 = vmatpush1.msra.mxu0 %v159
  %286 = vmatprep.subr.mxu0 0.0
  %287 = vmatpush1.msra.mxu0 %v160
  %288 = vmatprep.subr.mxu0 0.0
  %289 = vmatpush1.msra.mxu0 %v161
  %290 = vmatprep.subr.mxu0 0.0
  %291 = vmatpush1.msra.mxu0 %v162
  %292 = vmatprep.subr.mxu0 0.0
  %293 = vmatpush1.msra.mxu0 %v163
  %294 = vmatprep.subr.mxu0 0.0
  %295 = vmatpush1.msra.mxu0 %v164
  %296 = vmatprep.subr.mxu0 0.0
  %297 = vmatpush1.msra.mxu0 %v165
  %298 = vmatprep.subr.mxu0 0.0
  %299 = vmatpush1.msra.mxu0 %v166
  %300 = vmatprep.subr.mxu0 0.0
  %301 = vmatpush1.msra.mxu0 %v167
  %302 = vmatprep.subr.mxu0 0.0
  %303 = vmatpush1.msra.mxu0 0.0
  %304 = vmatprep.subr.mxu0 0.0
  %305 = vmatpush1.msra.mxu0 0.0
  %306 = vmatprep.subr.mxu0 0.0
  %307 = vmatpush1.msra.mxu0 0.0
  %308 = vmatprep.subr.mxu0 0.0
  %309 = vmatpush1.msra.mxu0 0.0
  %310 = vmatprep.subr.mxu0 0.0
  %311 = vmatpush1.msra.mxu0 0.0
  %312 = vmatprep.subr.mxu0 0.0
  %313 = vmatpush1.msra.mxu0 0.0
  %314 = vmatprep.subr.mxu0 0.0
  %315 = vmatpush1.msra.mxu0 0.0
  %316 = vmatprep.subr.mxu0 0.0
  %317 = vmatpush1.msra.mxu0 0.0
  %318 = vmatprep.subr.mxu0 0.0
  %319 = vmatpush1.msra.mxu0 0.0
  %320 = vmatprep.subr.mxu0 0.0
  %321 = vmatpush1.msra.mxu0 0.0
  %322 = vmatprep.subr.mxu0 0.0
  %323 = vmatpush1.msra.mxu0 0.0
  %324 = vmatprep.subr.mxu0 0.0
  %325 = vmatpush1.msra.mxu0 0.0
  %326 = vmatprep.subr.mxu0 0.0
  %327 = vmatpush1.msra.mxu0 0.0
  %328 = vmatprep.subr.mxu0 0.0
  %329 = vmatpush1.msra.mxu0 0.0
  %330 = vmatprep.subr.mxu0 0.0
  %331 = vmatpush1.msra.mxu0 0.0
  %332 = vmatprep.subr.mxu0 0.0
  %333 = vmatpush1.msra.mxu0 0.0
  %334 = vmatprep.mubr.f32.mxu0 0.0
  %335 = vmatmul.mubr.f32.gmra.mrb[0].mxu0 %v135
  %v336 = vpop.f32.mrb[0].mxu0
  %v337 = vadd.f32 %v252, %v336
  %v338 = vpop.f32.mrb[0].mxu0
  %339 = vmatprep.mubr.f32.mxu0 0.0
  %340 = vmatmul.mubr.f32.gmra.mrb[0].mxu0 %v136
  %v341 = vpop.f32.mrb[0].mxu0
  %v342 = vadd.f32 %v257, %v341
  %v343 = vpop.f32.mrb[0].mxu0
  %344 = vmatprep.mubr.f32.mxu0 0.0
  %345 = vmatmul.mubr.f32.gmra.mrb[0].mxu0 %v137
  %v346 = vpop.f32.mrb[0].mxu0
  %v347 = vadd.f32 %v262, %v346
  %v348 = vpop.f32.mrb[0].mxu0
  %349 = vmatprep.mubr.f32.mxu0 0.0
  %350 = vmatmul.mubr.f32.gmra.mrb[0].mxu0 %v138
  %v351 = vpop.f32.mrb[0].mxu0
  %v352 = vadd.f32 %v267, %v351
  %v353 = vpop.f32.mrb[0].mxu0
  %354 = vdwg.mxu0
  %s355 = scalar_lea.vmem %s1, 256
  %v356 = vld [vmem:[%s355] sm:$0xff]
  %v357 = vld [vmem:[%s355 + $0x8] sm:$0xff]
  %v358 = vld [vmem:[%s355 + $0x10] sm:$0xff]
  %v359 = vld [vmem:[%s355 + $0x18] sm:$0xff]
  %v360 = vld [vmem:[%s355 + $0x20] sm:$0xff]
  %v361 = vld [vmem:[%s355 + $0x28] sm:$0xff]
  %v362 = vld [vmem:[%s355 + $0x30] sm:$0xff]
  %v363 = vld [vmem:[%s355 + $0x38] sm:$0xff]
  %v364 = vld [vmem:[%s355 + $0x40] sm:$0xff]
  %v365 = vld [vmem:[%s355 + $0x48] sm:$0xff]
  %v366 = vld [vmem:[%s355 + $0x50] sm:$0xff]
  %v367 = vld [vmem:[%s355 + $0x58] sm:$0xff]
  %v368 = vld [vmem:[%s355 + $0x60] sm:$0xff]
  %v369 = vld [vmem:[%s355 + $0x68] sm:$0xff]
  %v370 = vld [vmem:[%s355 + $0x70] sm:$0xff]
  %v371 = vld [vmem:[%s355 + $0x78] sm:$0xff]
  %372 = vmatprep.subr.mxu0 0.0
  %373 = vmatpush1.msra.mxu0 %v356
  %374 = vmatprep.subr.mxu0 0.0
  %375 = vmatpush1.msra.mxu0 %v357
  %376 = vmatprep.subr.mxu0 0.0
  %377 = vmatpush1.msra.mxu0 %v358
  %378 = vmatprep.subr.mxu0 0.0
  %379 = vmatpush1.msra.mxu0 %v359
  %380 = vmatprep.subr.mxu0 0.0
  %381 = vmatpush1.msra.mxu0 %v360
  %382 = vmatprep.subr.mxu0 0.0
  %383 = vmatpush1.msra.mxu0 %v361
  %384 = vmatprep.subr.mxu0 0.0
  %385 = vmatpush1.msra.mxu0 %v362
  %386 = vmatprep.subr.mxu0 0.0
  %387 = vmatpush1.msra.mxu0 %v363
  %388 = vmatprep.subr.mxu0 0.0
  %389 = vmatpush1.msra.mxu0 %v364
  %390 = vmatprep.subr.mxu0 0.0
  %391 = vmatpush1.msra.mxu0 %v365
  %392 = vmatprep.subr.mxu0 0.0
  %393 = vmatpush1.msra.mxu0 %v366
  %394 = vmatprep.subr.mxu0 0.0
  %395 = vmatpush1.msra.mxu0 %v367
  %396 = vmatprep.subr.mxu0 0.0
  %397 = vmatpush1.msra.mxu0 %v368
  %398 = vmatprep.subr.mxu0 0.0
  %399 = vmatpush1.msra.mxu0 %v369
  %400 = vmatprep.subr.mxu0 0.0
  %401 = vmatpush1.msra.mxu0 %v370
  %402 = vmatprep.subr.mxu0 0.0
  %403 = vmatpush1.msra.mxu0 %v371
  %404 = vmatprep.subr.mxu0 0.0
  %405 = vmatpush1.msra.mxu0 0.0
  %406 = vmatprep.subr.mxu0 0.0
  %407 = vmatpush1.msra.mxu0 0.0
  %408 = vmatprep.subr.mxu0 0.0
  %409 = vmatpush1.msra.mxu0 0.0
  %410 = vmatprep.subr.mxu0 0.0
  %411 = vmatpush1.msra.mxu0 0.0
  %412 = vmatprep.subr.mxu0 0.0
  %413 = vmatpush1.msra.mxu0 0.0
  %414 = vmatprep.subr.mxu0 0.0
  %415 = vmatpush1.msra.mxu0 0.0
  %416 = vmatprep.subr.mxu0 0.0
  %417 = vmatpush1.msra.mxu0 0.0
  %418 = vmatprep.subr.mxu0 0.0
  %419 = vmatpush1.msra.mxu0 0.0
  %420 = vmatprep.subr.mxu0 0.0
  %421 = vmatpush1.msra.mxu0 0.0
  %422 = vmatprep.subr.mxu0 0.0
  %423 = vmatpush1.msra.mxu0 0.0
  %424 = vmatprep.subr.mxu0 0.0
  %425 = vmatpush1.msra.mxu0 0.0
  %426 = vmatprep.subr.mxu0 0.0
  %427 = vmatpush1.msra.mxu0 0.0
  %428 = vmatprep.subr.mxu0 0.0
  %429 = vmatpush1.msra.mxu0 0.0
  %430 = vmatprep.subr.mxu0 0.0
  %431 = vmatpush1.msra.mxu0 0.0
  %432 = vmatprep.subr.mxu0 0.0
  %433 = vmatpush1.msra.mxu0 0.0
  %434 = vmatprep.subr.mxu0 0.0
  %435 = vmatpush1.msra.mxu0 0.0
  %436 = vmatprep.mubr.f32.mxu0 0.0
  %437 = vmatmul.mubr.f32.gmra.mrb[0].mxu0 %v148
  %v438 = vpop.f32.mrb[0].mxu0
  %v439 = vadd.f32 0.0, %v438
  %v440 = vpop.f32.mrb[0].mxu0
  %441 = vmatprep.mubr.f32.mxu0 0.0
  %442 = vmatmul.mubr.f32.gmra.mrb[0].mxu0 %v149
  %v443 = vpop.f32.mrb[0].mxu0
  %v444 = vadd.f32 0.0, %v443
  %v445 = vpop.f32.mrb[0].mxu0
  %446 = vmatprep.mubr.f32.mxu0 0.0
  %447 = vmatmul.mubr.f32.gmra.mrb[0].mxu0 %v150
  %v448 = vpop.f32.mrb[0].mxu0
  %v449 = vadd.f32 0.0, %v448
  %v450 = vpop.f32.mrb[0].mxu0
  %451 = vmatprep.mubr.f32.mxu0 0.0
  %452 = vmatmul.mubr.f32.gmra.mrb[0].mxu0 %v151
  %v453 = vpop.f32.mrb[0].mxu0
  %v454 = vadd.f32 0.0, %v453
  %v455 = vpop.f32.mrb[0].mxu0
  %456 = vdwg.mxu0
  %v457 = vadd.f32 %v337, %v439
  %v458 = vadd.f32 %v342, %v444
  %v459 = vadd.f32 %v347, %v449
  %v460 = vadd.f32 %v352, %v454
  %v461 = vld [vmem:[%s4] sm:$0x1]
  %v462 = vld [vmem:[%s5] sm:$0x1]
  %v463 = vadd.f32 %v457, %v458
  %v464 = vadd.f32 %v463, %v459
  %v465 = vadd.f32 %v464, %v460
  %v466 = vrot.slane %v465, 4
  %v467 = vadd.f32 %v465, %v466
  %v468 = vrot.slane %v467, 2
  %v469 = vadd.f32 %v467, %v468
  %v470 = vrot.slane %v469, 1
  %v471 = vadd.f32 %v469, %v470
  %472 = vmatprep.subr.mxu0 0.0
  %473 = vmatpush1.msra.mxu0 %v29
  %474 = vmatprep.subr.mxu0 0.0
  %475 = vmatpush1.msra.mxu0 %v30
  %476 = vmatprep.subr.mxu0 0.0
  %477 = vmatpush1.msra.mxu0 %v31
  %478 = vmatprep.subr.mxu0 0.0
  %479 = vmatpush1.msra.mxu0 %v32
  %480 = vmatprep.subr.mxu0 0.0
  %481 = vmatpush1.msra.mxu0 %v33
  %482 = vmatprep.subr.mxu0 0.0
  %483 = vmatpush1.msra.mxu0 %v34
  %484 = vmatprep.subr.mxu0 0.0
  %485 = vmatpush1.msra.mxu0 %v35
  %486 = vmatprep.subr.mxu0 0.0
  %487 = vmatpush1.msra.mxu0 %v36
  %488 = vmatprep.subr.mxu0 0.0
  %489 = vmatpush1.msra.mxu0 %v37
  %490 = vmatprep.subr.mxu0 0.0
  %491 = vmatpush1.msra.mxu0 %v38
  %492 = vmatprep.subr.mxu0 0.0
  %493 = vmatpush1.msra.mxu0 %v39
  %494 = vmatprep.subr.mxu0 0.0
  %495 = vmatpush1.msra.mxu0 %v40
  %496 = vmatprep.subr.mxu0 0.0
  %497 = vmatpush1.msra.mxu0 %v41
  %498 = vmatprep.subr.mxu0 0.0
  %499 = vmatpush1.msra.mxu0 %v42
  %500 = vmatprep.subr.mxu0 0.0
  %501 = vmatpush1.msra.mxu0 %v43
  %502 = vmatprep.subr.mxu0 0.0
  %503 = vmatpush1.msra.mxu0 %v44
  %504 = vmatprep.subr.mxu0 0.0
  %505 = vmatpush1.msra.mxu0 0.0
  %506 = vmatprep.subr.mxu0 0.0
  %507 = vmatpush1.msra.mxu0 0.0
  %508 = vmatprep.subr.mxu0 0.0
  %509 = vmatpush1.msra.mxu0 0.0
  %510 = vmatprep.subr.mxu0 0.0
  %511 = vmatpush1.msra.mxu0 0.0
  %512 = vmatprep.subr.mxu0 0.0
  %513 = vmatpush1.msra.mxu0 0.0
  %514 = vmatprep.subr.mxu0 0.0
  %515 = vmatpush1.msra.mxu0 0.0
  %516 = vmatprep.subr.mxu0 0.0
  %517 = vmatpush1.msra.mxu0 0.0
  %518 = vmatprep.subr.mxu0 0.0
  %519 = vmatpush1.msra.mxu0 0.0
  %520 = vmatprep.subr.mxu0 0.0
  %521 = vmatpush1.msra.mxu0 0.0
  %522 = vmatprep.subr.mxu0 0.0
  %523 = vmatpush1.msra.mxu0 0.0
  %524 = vmatprep.subr.mxu0 0.0
  %525 = vmatpush1.msra.mxu0 0.0
  %526 = vmatprep.subr.mxu0 0.0
  %527 = vmatpush1.msra.mxu0 0.0
  %528 = vmatprep.subr.mxu0 0.0
  %529 = vmatpush1.msra.mxu0 0.0
  %530 = vmatprep.subr.mxu0 0.0
  %531 = vmatpush1.msra.mxu0 0.0
  %532 = vmatprep.subr.mxu0 0.0
  %533 = vmatpush1.msra.mxu0 0.0
  %534 = vmatprep.subr.mxu0 0.0
  %535 = vmatpush1.msra.mxu0 0.0
  %536 = vmatprep.mubr.f32.mxu0 0.0
  %537 = vmatmul.mubr.f32.gmra.mrb[0].mxu0 %v471
  %v538 = vpop.f32.mrb[0].mxu0
  %v539 = vadd.f32 0.0, %v538
  %v540 = vpop.f32.mrb[0].mxu0
  %541 = vdwg.mxu0
  %v542 = vmul.f32 %v539, 0.001953125
  %v543 = vlaneseq
  %v544 = vshrl.u32 %v543, 7
  %v545 = vsub.s32 0, %v544
  %v546 = vrot.slane %v542, %v545
  %v547 = vsub.f32 %v457, %v546
  %v548 = vsub.f32 %v458, %v546
  %v549 = vsub.f32 %v459, %v546
  %v550 = vsub.f32 %v460, %v546
  %v551 = vmul.f32 %v547, %v547
  %v552 = vmul.f32 %v548, %v548
  %v553 = vmul.f32 %v549, %v549
  %v554 = vmul.f32 %v550, %v550
  %v555 = vadd.f32 %v551, %v552
  %v556 = vadd.f32 %v555, %v553
  %v557 = vadd.f32 %v556, %v554
  %v558 = vrot.slane %v557, 4
  %v559 = vadd.f32 %v557, %v558
  %v560 = vrot.slane %v559, 2
  %v561 = vadd.f32 %v559, %v560
  %v562 = vrot.slane %v561, 1
  %v563 = vadd.f32 %v561, %v562
  %564 = vmatprep.subr.mxu0 0.0
  %565 = vmatpush1.msra.mxu0 %v29
  %566 = vmatprep.subr.mxu0 0.0
  %567 = vmatpush1.msra.mxu0 %v30
  %568 = vmatprep.subr.mxu0 0.0
  %569 = vmatpush1.msra.mxu0 %v31
  %570 = vmatprep.subr.mxu0 0.0
  %571 = vmatpush1.msra.mxu0 %v32
  %572 = vmatprep.subr.mxu0 0.0
  %573 = vmatpush1.msra.mxu0 %v33
  %574 = vmatprep.subr.mxu0 0.0
  %575 = vmatpush1.msra.mxu0 %v34
  %576 = vmatprep.subr.mxu0 0.0
  %577 = vmatpush1.msra.mxu0 %v35
  %578 = vmatprep.subr.mxu0 0.0
  %579 = vmatpush1.msra.mxu0 %v36
  %580 = vmatprep.subr.mxu0 0.0
  %581 = vmatpush1.msra.mxu0 %v37
  %582 = vmatprep.subr.mxu0 0.0
  %583 = vmatpush1.msra.mxu0 %v38
  %584 = vmatprep.subr.mxu0 0.0
  %585 = vmatpush1.msra.mxu0 %v39
  %586 = vmatprep.subr.mxu0 0.0
  %587 = vmatpush1.msra.mxu0 %v40
  %588 = vmatprep.subr.mxu0 0.0
  %589 = vmatpush1.msra.mxu0 %v41
  %590 = vmatprep.subr.mxu0 0.0
  %591 = vmatpush1.msra.mxu0 %v42
  %592 = vmatprep.subr.mxu0 0.0
  %593 = vmatpush1.msra.mxu0 %v43
  %594 = vmatprep.subr.mxu0 0.0
  %595 = vmatpush1.msra.mxu0 %v44
  %596 = vmatprep.subr.mxu0 0.0
  %597 = vmatpush1.msra.mxu0 0.0
  %598 = vmatprep.subr.mxu0 0.0
  %599 = vmatpush1.msra.mxu0 0.0
  %600 = vmatprep.subr.mxu0 0.0
  %601 = vmatpush1.msra.mxu0 0.0
  %602 = vmatprep.subr.mxu0 0.0
  %603 = vmatpush1.msra.mxu0 0.0
  %604 = vmatprep.subr.mxu0 0.0
  %605 = vmatpush1.msra.mxu0 0.0
  %606 = vmatprep.subr.mxu0 0.0
  %607 = vmatpush1.msra.mxu0 0.0
  %608 = vmatprep.subr.mxu0 0.0
  %609 = vmatpush1.msra.mxu0 0.0
  %610 = vmatprep.subr.mxu0 0.0
  %611 = vmatpush1.msra.mxu0 0.0
  %612 = vmatprep.subr.mxu0 0.0
  %613 = vmatpush1.msra.mxu0 0.0
  %614 = vmatprep.subr.mxu0 0.0
  %615 = vmatpush1.msra.mxu0 0.0
  %616 = vmatprep.subr.mxu0 0.0
  %617 = vmatpush1.msra.mxu0 0.0
  %618 = vmatprep.subr.mxu0 0.0
  %619 = vmatpush1.msra.mxu0 0.0
  %620 = vmatprep.subr.mxu0 0.0
  %621 = vmatpush1.msra.mxu0 0.0
  %622 = vmatprep.subr.mxu0 0.0
  %623 = vmatpush1.msra.mxu0 0.0
  %624 = vmatprep.subr.mxu0 0.0
  %625 = vmatpush1.msra.mxu0 0.0
  %626 = vmatprep.subr.mxu0 0.0
  %627 = vmatpush1.msra.mxu0 0.0
  %628 = vmatprep.mubr.f32.mxu0 0.0
  %629 = vmatmul.mubr.f32.gmra.mrb[0].mxu0 %v563
  %v630 = vpop.f32.mrb[0].mxu0
  %v631 = vadd.f32 0.0, %v630
  %v632 = vpop.f32.mrb[0].mxu0
  %633 = vdwg.mxu0
  %v634 = vmul.f32 %v631, 0.001953125
  %v635 = vadd.f32 %v634, 1e-05
  %v636 = vrsqrt.pop %v635
  %v637 = vmul.f32 %v461, %v636
  %v639 = vlaneseq
  %v640 = vshrl.u32 %v639, 7
  %v641 = vsub.s32 0, %v640
  %v642 = vrot.slane %v637, %v641
  %v644 = vmul.f32 %v547, %v642
  %v645 = vmul.f32 %v548, %v642
  %v646 = vmul.f32 %v549, %v642
  %v647 = vmul.f32 %v550, %v642
  %v649 = vlaneseq
  %v650 = vshrl.u32 %v649, 7
  %v651 = vsub.s32 0, %v650
  %v652 = vrot.slane %v462, %v651
  %v654 = vadd.f32 %v644, %v652
  %v655 = vadd.f32 %v645, %v652
  %v656 = vadd.f32 %v646, %v652
  %v657 = vadd.f32 %v647, %v652
  %v658 = vmax.f32 %v654, 0.0
  %v659 = vmax.f32 %v655, 0.0
  %v660 = vmax.f32 %v656, 0.0
  %v661 = vmax.f32 %v657, 0.0
  %v662 = vrot.slane %v658, 7
  %v663 = vrot.slane %v659, 7
  %v664 = vrot.slane %v660, 7
  %v665 = vrot.slane %v661, 7
  %v666 = vsel %vm130, %v664, %v665
  %v667 = vsel %vm130, %v663, %v664
  %v668 = vsel %vm130, %v662, %v663
  %v669 = vsel %vm130, %v665, %v662
  %v670 = vmul.f32 %v669, %v106
  %v671 = vmul.f32 %v668, %v107
  %v672 = vmul.f32 %v667, %v108
  %v673 = vmul.f32 %v666, %v109
  %v674 = vrot.slane %v658, 1
  %v675 = vrot.slane %v659, 1
  %v676 = vrot.slane %v660, 1
  %v677 = vrot.slane %v661, 1
  %v678 = vsel %vm143, %v676, %v677
  %v679 = vsel %vm143, %v675, %v676
  %v680 = vsel %vm143, %v674, %v675
  %v681 = vsel %vm143, %v677, %v674
  %v682 = vmul.f32 %v680, %v118
  %v683 = vmul.f32 %v679, %v119
  %v684 = vmul.f32 %v678, %v120
  %v685 = vmul.f32 %v681, %v121
  %v686 = vld [vmem:[%s2] sm:$0xff]
  %v687 = vld [vmem:[%s2 + $0x8] sm:$0xff]
  %v688 = vld [vmem:[%s2 + $0x10] sm:$0xff]
  %v689 = vld [vmem:[%s2 + $0x18] sm:$0xff]
  %v690 = vld [vmem:[%s2 + $0x20] sm:$0xff]
  %v691 = vld [vmem:[%s2 + $0x28] sm:$0xff]
  %v692 = vld [vmem:[%s2 + $0x30] sm:$0xff]
  %v693 = vld [vmem:[%s2 + $0x38] sm:$0xff]
  %v694 = vld [vmem:[%s2 + $0x40] sm:$0xff]
  %v695 = vld [vmem:[%s2 + $0x48] sm:$0xff]
  %v696 = vld [vmem:[%s2 + $0x50] sm:$0xff]
  %v697 = vld [vmem:[%s2 + $0x58] sm:$0xff]
  %v698 = vld [vmem:[%s2 + $0x60] sm:$0xff]
  %v699 = vld [vmem:[%s2 + $0x68] sm:$0xff]
  %v700 = vld [vmem:[%s2 + $0x70] sm:$0xff]
  %v701 = vld [vmem:[%s2 + $0x78] sm:$0xff]
  %s702 = scalar_lea.vmem %s2, 128
  %v703 = vld [vmem:[%s702] sm:$0xff]
  %v704 = vld [vmem:[%s702 + $0x8] sm:$0xff]
  %v705 = vld [vmem:[%s702 + $0x10] sm:$0xff]
  %v706 = vld [vmem:[%s702 + $0x18] sm:$0xff]
  %v707 = vld [vmem:[%s702 + $0x20] sm:$0xff]
  %v708 = vld [vmem:[%s702 + $0x28] sm:$0xff]
  %v709 = vld [vmem:[%s702 + $0x30] sm:$0xff]
  %v710 = vld [vmem:[%s702 + $0x38] sm:$0xff]
  %v711 = vld [vmem:[%s702 + $0x40] sm:$0xff]
  %v712 = vld [vmem:[%s702 + $0x48] sm:$0xff]
  %v713 = vld [vmem:[%s702 + $0x50] sm:$0xff]
  %v714 = vld [vmem:[%s702 + $0x58] sm:$0xff]
  %v715 = vld [vmem:[%s702 + $0x60] sm:$0xff]
  %v716 = vld [vmem:[%s702 + $0x68] sm:$0xff]
  %v717 = vld [vmem:[%s702 + $0x70] sm:$0xff]
  %v718 = vld [vmem:[%s702 + $0x78] sm:$0xff]
  %719 = vmatprep.subr.mxu0 0.0
  %720 = vmatpush1.msra.mxu0 %v703
  %721 = vmatprep.subr.mxu0 0.0
  %722 = vmatpush1.msra.mxu0 %v704
  %723 = vmatprep.subr.mxu0 0.0
  %724 = vmatpush1.msra.mxu0 %v705
  %725 = vmatprep.subr.mxu0 0.0
  %726 = vmatpush1.msra.mxu0 %v706
  %727 = vmatprep.subr.mxu0 0.0
  %728 = vmatpush1.msra.mxu0 %v707
  %729 = vmatprep.subr.mxu0 0.0
  %730 = vmatpush1.msra.mxu0 %v708
  %731 = vmatprep.subr.mxu0 0.0
  %732 = vmatpush1.msra.mxu0 %v709
  %733 = vmatprep.subr.mxu0 0.0
  %734 = vmatpush1.msra.mxu0 %v710
  %735 = vmatprep.subr.mxu0 0.0
  %736 = vmatpush1.msra.mxu0 %v711
  %737 = vmatprep.subr.mxu0 0.0
  %738 = vmatpush1.msra.mxu0 %v712
  %739 = vmatprep.subr.mxu0 0.0
  %740 = vmatpush1.msra.mxu0 %v713
  %741 = vmatprep.subr.mxu0 0.0
  %742 = vmatpush1.msra.mxu0 %v714
  %743 = vmatprep.subr.mxu0 0.0
  %744 = vmatpush1.msra.mxu0 %v715
  %745 = vmatprep.subr.mxu0 0.0
  %746 = vmatpush1.msra.mxu0 %v716
  %747 = vmatprep.subr.mxu0 0.0
  %748 = vmatpush1.msra.mxu0 %v717
  %749 = vmatprep.subr.mxu0 0.0
  %750 = vmatpush1.msra.mxu0 %v718
  %751 = vmatprep.subr.mxu0 0.0
  %752 = vmatpush1.msra.mxu0 0.0
  %753 = vmatprep.subr.mxu0 0.0
  %754 = vmatpush1.msra.mxu0 0.0
  %755 = vmatprep.subr.mxu0 0.0
  %756 = vmatpush1.msra.mxu0 0.0
  %757 = vmatprep.subr.mxu0 0.0
  %758 = vmatpush1.msra.mxu0 0.0
  %759 = vmatprep.subr.mxu0 0.0
  %760 = vmatpush1.msra.mxu0 0.0
  %761 = vmatprep.subr.mxu0 0.0
  %762 = vmatpush1.msra.mxu0 0.0
  %763 = vmatprep.subr.mxu0 0.0
  %764 = vmatpush1.msra.mxu0 0.0
  %765 = vmatprep.subr.mxu0 0.0
  %766 = vmatpush1.msra.mxu0 0.0
  %767 = vmatprep.subr.mxu0 0.0
  %768 = vmatpush1.msra.mxu0 0.0
  %769 = vmatprep.subr.mxu0 0.0
  %770 = vmatpush1.msra.mxu0 0.0
  %771 = vmatprep.subr.mxu0 0.0
  %772 = vmatpush1.msra.mxu0 0.0
  %773 = vmatprep.subr.mxu0 0.0
  %774 = vmatpush1.msra.mxu0 0.0
  %775 = vmatprep.subr.mxu0 0.0
  %776 = vmatpush1.msra.mxu0 0.0
  %777 = vmatprep.subr.mxu0 0.0
  %778 = vmatpush1.msra.mxu0 0.0
  %779 = vmatprep.subr.mxu0 0.0
  %780 = vmatpush1.msra.mxu0 0.0
  %781 = vmatprep.subr.mxu0 0.0
  %782 = vmatpush1.msra.mxu0 0.0
  %783 = vmatprep.mubr.f32.mxu0 0.0
  %784 = vmatmul.mubr.f32.gmra.mrb[0].mxu0 %v658
  %v785 = vpop.f32.mrb[0].mxu0
  %v786 = vadd.f32 0.0, %v785
  %v787 = vpop.f32.mrb[0].mxu0
  %788 = vmatprep.mubr.f32.mxu0 0.0
  %789 = vmatmul.mubr.f32.gmra.mrb[0].mxu0 %v659
  %v790 = vpop.f32.mrb[0].mxu0
  %v791 = vadd.f32 0.0, %v790
  %v792 = vpop.f32.mrb[0].mxu0
  %793 = vmatprep.mubr.f32.mxu0 0.0
  %794 = vmatmul.mubr.f32.gmra.mrb[0].mxu0 %v660
  %v795 = vpop.f32.mrb[0].mxu0
  %v796 = vadd.f32 0.0, %v795
  %v797 = vpop.f32.mrb[0].mxu0
  %798 = vmatprep.mubr.f32.mxu0 0.0
  %799 = vmatmul.mubr.f32.gmra.mrb[0].mxu0 %v661
  %v800 = vpop.f32.mrb[0].mxu0
  %v801 = vadd.f32 0.0, %v800
  %v802 = vpop.f32.mrb[0].mxu0
  %803 = vdwg.mxu0
  %804 = vmatprep.subr.mxu0 0.0
  %805 = vmatpush1.msra.mxu0 %v686
  %806 = vmatprep.subr.mxu0 0.0
  %807 = vmatpush1.msra.mxu0 %v687
  %808 = vmatprep.subr.mxu0 0.0
  %809 = vmatpush1.msra.mxu0 %v688
  %810 = vmatprep.subr.mxu0 0.0
  %811 = vmatpush1.msra.mxu0 %v689
  %812 = vmatprep.subr.mxu0 0.0
  %813 = vmatpush1.msra.mxu0 %v690
  %814 = vmatprep.subr.mxu0 0.0
  %815 = vmatpush1.msra.mxu0 %v691
  %816 = vmatprep.subr.mxu0 0.0
  %817 = vmatpush1.msra.mxu0 %v692
  %818 = vmatprep.subr.mxu0 0.0
  %819 = vmatpush1.msra.mxu0 %v693
  %820 = vmatprep.subr.mxu0 0.0
  %821 = vmatpush1.msra.mxu0 %v694
  %822 = vmatprep.subr.mxu0 0.0
  %823 = vmatpush1.msra.mxu0 %v695
  %824 = vmatprep.subr.mxu0 0.0
  %825 = vmatpush1.msra.mxu0 %v696
  %826 = vmatprep.subr.mxu0 0.0
  %827 = vmatpush1.msra.mxu0 %v697
  %828 = vmatprep.subr.mxu0 0.0
  %829 = vmatpush1.msra.mxu0 %v698
  %830 = vmatprep.subr.mxu0 0.0
  %831 = vmatpush1.msra.mxu0 %v699
  %832 = vmatprep.subr.mxu0 0.0
  %833 = vmatpush1.msra.mxu0 %v700
  %834 = vmatprep.subr.mxu0 0.0
  %835 = vmatpush1.msra.mxu0 %v701
  %836 = vmatprep.subr.mxu0 0.0
  %837 = vmatpush1.msra.mxu0 0.0
  %838 = vmatprep.subr.mxu0 0.0
  %839 = vmatpush1.msra.mxu0 0.0
  %840 = vmatprep.subr.mxu0 0.0
  %841 = vmatpush1.msra.mxu0 0.0
  %842 = vmatprep.subr.mxu0 0.0
  %843 = vmatpush1.msra.mxu0 0.0
  %844 = vmatprep.subr.mxu0 0.0
  %845 = vmatpush1.msra.mxu0 0.0
  %846 = vmatprep.subr.mxu0 0.0
  %847 = vmatpush1.msra.mxu0 0.0
  %848 = vmatprep.subr.mxu0 0.0
  %849 = vmatpush1.msra.mxu0 0.0
  %850 = vmatprep.subr.mxu0 0.0
  %851 = vmatpush1.msra.mxu0 0.0
  %852 = vmatprep.subr.mxu0 0.0
  %853 = vmatpush1.msra.mxu0 0.0
  %854 = vmatprep.subr.mxu0 0.0
  %855 = vmatpush1.msra.mxu0 0.0
  %856 = vmatprep.subr.mxu0 0.0
  %857 = vmatpush1.msra.mxu0 0.0
  %858 = vmatprep.subr.mxu0 0.0
  %859 = vmatpush1.msra.mxu0 0.0
  %860 = vmatprep.subr.mxu0 0.0
  %861 = vmatpush1.msra.mxu0 0.0
  %862 = vmatprep.subr.mxu0 0.0
  %863 = vmatpush1.msra.mxu0 0.0
  %864 = vmatprep.subr.mxu0 0.0
  %865 = vmatpush1.msra.mxu0 0.0
  %866 = vmatprep.subr.mxu0 0.0
  %867 = vmatpush1.msra.mxu0 0.0
  %868 = vmatprep.mubr.f32.mxu0 0.0
  %869 = vmatmul.mubr.f32.gmra.mrb[0].mxu0 %v670
  %v870 = vpop.f32.mrb[0].mxu0
  %v871 = vadd.f32 %v786, %v870
  %v872 = vpop.f32.mrb[0].mxu0
  %873 = vmatprep.mubr.f32.mxu0 0.0
  %874 = vmatmul.mubr.f32.gmra.mrb[0].mxu0 %v671
  %v875 = vpop.f32.mrb[0].mxu0
  %v876 = vadd.f32 %v791, %v875
  %v877 = vpop.f32.mrb[0].mxu0
  %878 = vmatprep.mubr.f32.mxu0 0.0
  %879 = vmatmul.mubr.f32.gmra.mrb[0].mxu0 %v672
  %v880 = vpop.f32.mrb[0].mxu0
  %v881 = vadd.f32 %v796, %v880
  %v882 = vpop.f32.mrb[0].mxu0
  %883 = vmatprep.mubr.f32.mxu0 0.0
  %884 = vmatmul.mubr.f32.gmra.mrb[0].mxu0 %v673
  %v885 = vpop.f32.mrb[0].mxu0
  %v886 = vadd.f32 %v801, %v885
  %v887 = vpop.f32.mrb[0].mxu0
  %888 = vdwg.mxu0
  %s889 = scalar_lea.vmem %s2, 256
  %v890 = vld [vmem:[%s889] sm:$0xff]
  %v891 = vld [vmem:[%s889 + $0x8] sm:$0xff]
  %v892 = vld [vmem:[%s889 + $0x10] sm:$0xff]
  %v893 = vld [vmem:[%s889 + $0x18] sm:$0xff]
  %v894 = vld [vmem:[%s889 + $0x20] sm:$0xff]
  %v895 = vld [vmem:[%s889 + $0x28] sm:$0xff]
  %v896 = vld [vmem:[%s889 + $0x30] sm:$0xff]
  %v897 = vld [vmem:[%s889 + $0x38] sm:$0xff]
  %v898 = vld [vmem:[%s889 + $0x40] sm:$0xff]
  %v899 = vld [vmem:[%s889 + $0x48] sm:$0xff]
  %v900 = vld [vmem:[%s889 + $0x50] sm:$0xff]
  %v901 = vld [vmem:[%s889 + $0x58] sm:$0xff]
  %v902 = vld [vmem:[%s889 + $0x60] sm:$0xff]
  %v903 = vld [vmem:[%s889 + $0x68] sm:$0xff]
  %v904 = vld [vmem:[%s889 + $0x70] sm:$0xff]
  %v905 = vld [vmem:[%s889 + $0x78] sm:$0xff]
  %906 = vmatprep.subr.mxu0 0.0
  %907 = vmatpush1.msra.mxu0 %v890
  %908 = vmatprep.subr.mxu0 0.0
  %909 = vmatpush1.msra.mxu0 %v891
  %910 = vmatprep.subr.mxu0 0.0
  %911 = vmatpush1.msra.mxu0 %v892
  %912 = vmatprep.subr.mxu0 0.0
  %913 = vmatpush1.msra.mxu0 %v893
  %914 = vmatprep.subr.mxu0 0.0
  %915 = vmatpush1.msra.mxu0 %v894
  %916 = vmatprep.subr.mxu0 0.0
  %917 = vmatpush1.msra.mxu0 %v895
  %918 = vmatprep.subr.mxu0 0.0
  %919 = vmatpush1.msra.mxu0 %v896
  %920 = vmatprep.subr.mxu0 0.0
  %921 = vmatpush1.msra.mxu0 %v897
  %922 = vmatprep.subr.mxu0 0.0
  %923 = vmatpush1.msra.mxu0 %v898
  %924 = vmatprep.subr.mxu0 0.0
  %925 = vmatpush1.msra.mxu0 %v899
  %926 = vmatprep.subr.mxu0 0.0
  %927 = vmatpush1.msra.mxu0 %v900
  %928 = vmatprep.subr.mxu0 0.0
  %929 = vmatpush1.msra.mxu0 %v901
  %930 = vmatprep.subr.mxu0 0.0
  %931 = vmatpush1.msra.mxu0 %v902
  %932 = vmatprep.subr.mxu0 0.0
  %933 = vmatpush1.msra.mxu0 %v903
  %934 = vmatprep.subr.mxu0 0.0
  %935 = vmatpush1.msra.mxu0 %v904
  %936 = vmatprep.subr.mxu0 0.0
  %937 = vmatpush1.msra.mxu0 %v905
  %938 = vmatprep.subr.mxu0 0.0
  %939 = vmatpush1.msra.mxu0 0.0
  %940 = vmatprep.subr.mxu0 0.0
  %941 = vmatpush1.msra.mxu0 0.0
  %942 = vmatprep.subr.mxu0 0.0
  %943 = vmatpush1.msra.mxu0 0.0
  %944 = vmatprep.subr.mxu0 0.0
  %945 = vmatpush1.msra.mxu0 0.0
  %946 = vmatprep.subr.mxu0 0.0
  %947 = vmatpush1.msra.mxu0 0.0
  %948 = vmatprep.subr.mxu0 0.0
  %949 = vmatpush1.msra.mxu0 0.0
  %950 = vmatprep.subr.mxu0 0.0
  %951 = vmatpush1.msra.mxu0 0.0
  %952 = vmatprep.subr.mxu0 0.0
  %953 = vmatpush1.msra.mxu0 0.0
  %954 = vmatprep.subr.mxu0 0.0
  %955 = vmatpush1.msra.mxu0 0.0
  %956 = vmatprep.subr.mxu0 0.0
  %957 = vmatpush1.msra.mxu0 0.0
  %958 = vmatprep.subr.mxu0 0.0
  %959 = vmatpush1.msra.mxu0 0.0
  %960 = vmatprep.subr.mxu0 0.0
  %961 = vmatpush1.msra.mxu0 0.0
  %962 = vmatprep.subr.mxu0 0.0
  %963 = vmatpush1.msra.mxu0 0.0
  %964 = vmatprep.subr.mxu0 0.0
  %965 = vmatpush1.msra.mxu0 0.0
  %966 = vmatprep.subr.mxu0 0.0
  %967 = vmatpush1.msra.mxu0 0.0
  %968 = vmatprep.subr.mxu0 0.0
  %969 = vmatpush1.msra.mxu0 0.0
  %970 = vmatprep.mubr.f32.mxu0 0.0
  %971 = vmatmul.mubr.f32.gmra.mrb[0].mxu0 %v682
  %v972 = vpop.f32.mrb[0].mxu0
  %v973 = vadd.f32 0.0, %v972
  %v974 = vpop.f32.mrb[0].mxu0
  %975 = vmatprep.mubr.f32.mxu0 0.0
  %976 = vmatmul.mubr.f32.gmra.mrb[0].mxu0 %v683
  %v977 = vpop.f32.mrb[0].mxu0
  %v978 = vadd.f32 0.0, %v977
  %v979 = vpop.f32.mrb[0].mxu0
  %980 = vmatprep.mubr.f32.mxu0 0.0
  %981 = vmatmul.mubr.f32.gmra.mrb[0].mxu0 %v684
  %v982 = vpop.f32.mrb[0].mxu0
  %v983 = vadd.f32 0.0, %v982
  %v984 = vpop.f32.mrb[0].mxu0
  %985 = vmatprep.mubr.f32.mxu0 0.0
  %986 = vmatmul.mubr.f32.gmra.mrb[0].mxu0 %v685
  %v987 = vpop.f32.mrb[0].mxu0
  %v988 = vadd.f32 0.0, %v987
  %v989 = vpop.f32.mrb[0].mxu0
  %990 = vdwg.mxu0
  %v991 = vadd.f32 %v871, %v973
  %v992 = vadd.f32 %v876, %v978
  %v993 = vadd.f32 %v881, %v983
  %v994 = vadd.f32 %v886, %v988
  %v995 = vld [vmem:[%s6] sm:$0x1]
  %v996 = vld [vmem:[%s7] sm:$0x1]
  %v997 = vadd.f32 %v991, %v992
  %v998 = vadd.f32 %v997, %v993
  %v999 = vadd.f32 %v998, %v994
  %v1000 = vrot.slane %v999, 4
  %v1001 = vadd.f32 %v999, %v1000
  %v1002 = vrot.slane %v1001, 2
  %v1003 = vadd.f32 %v1001, %v1002
  %v1004 = vrot.slane %v1003, 1
  %v1005 = vadd.f32 %v1003, %v1004
  %1006 = vmatprep.subr.mxu0 0.0
  %1007 = vmatpush1.msra.mxu0 %v29
  %1008 = vmatprep.subr.mxu0 0.0
  %1009 = vmatpush1.msra.mxu0 %v30
  %1010 = vmatprep.subr.mxu0 0.0
  %1011 = vmatpush1.msra.mxu0 %v31
  %1012 = vmatprep.subr.mxu0 0.0
  %1013 = vmatpush1.msra.mxu0 %v32
  %1014 = vmatprep.subr.mxu0 0.0
  %1015 = vmatpush1.msra.mxu0 %v33
  %1016 = vmatprep.subr.mxu0 0.0
  %1017 = vmatpush1.msra.mxu0 %v34
  %1018 = vmatprep.subr.mxu0 0.0
  %1019 = vmatpush1.msra.mxu0 %v35
  %1020 = vmatprep.subr.mxu0 0.0
  %1021 = vmatpush1.msra.mxu0 %v36
  %1022 = vmatprep.subr.mxu0 0.0
  %1023 = vmatpush1.msra.mxu0 %v37
  %1024 = vmatprep.subr.mxu0 0.0
  %1025 = vmatpush1.msra.mxu0 %v38
  %1026 = vmatprep.subr.mxu0 0.0
  %1027 = vmatpush1.msra.mxu0 %v39
  %1028 = vmatprep.subr.mxu0 0.0
  %1029 = vmatpush1.msra.mxu0 %v40
  %1030 = vmatprep.subr.mxu0 0.0
  %1031 = vmatpush1.msra.mxu0 %v41
  %1032 = vmatprep.subr.mxu0 0.0
  %1033 = vmatpush1.msra.mxu0 %v42
  %1034 = vmatprep.subr.mxu0 0.0
  %1035 = vmatpush1.msra.mxu0 %v43
  %1036 = vmatprep.subr.mxu0 0.0
  %1037 = vmatpush1.msra.mxu0 %v44
  %1038 = vmatprep.subr.mxu0 0.0
  %1039 = vmatpush1.msra.mxu0 0.0
  %1040 = vmatprep.subr.mxu0 0.0
  %1041 = vmatpush1.msra.mxu0 0.0
  %1042 = vmatprep.subr.mxu0 0.0
  %1043 = vmatpush1.msra.mxu0 0.0
  %1044 = vmatprep.subr.mxu0 0.0
  %1045 = vmatpush1.msra.mxu0 0.0
  %1046 = vmatprep.subr.mxu0 0.0
  %1047 = vmatpush1.msra.mxu0 0.0
  %1048 = vmatprep.subr.mxu0 0.0
  %1049 = vmatpush1.msra.mxu0 0.0
  %1050 = vmatprep.subr.mxu0 0.0
  %1051 = vmatpush1.msra.mxu0 0.0
  %1052 = vmatprep.subr.mxu0 0.0
  %1053 = vmatpush1.msra.mxu0 0.0
  %1054 = vmatprep.subr.mxu0 0.0
  %1055 = vmatpush1.msra.mxu0 0.0
  %1056 = vmatprep.subr.mxu0 0.0
  %1057 = vmatpush1.msra.mxu0 0.0
  %1058 = vmatprep.subr.mxu0 0.0
  %1059 = vmatpush1.msra.mxu0 0.0
  %1060 = vmatprep.subr.mxu0 0.0
  %1061 = vmatpush1.msra.mxu0 0.0
  %1062 = vmatprep.subr.mxu0 0.0
  %1063 = vmatpush1.msra.mxu0 0.0
  %1064 = vmatprep.subr.mxu0 0.0
  %1065 = vmatpush1.msra.mxu0 0.0
  %1066 = vmatprep.subr.mxu0 0.0
  %1067 = vmatpush1.msra.mxu0 0.0
  %1068 = vmatprep.subr.mxu0 0.0
  %1069 = vmatpush1.msra.mxu0 0.0
  %1070 = vmatprep.mubr.f32.mxu0 0.0
  %1071 = vmatmul.mubr.f32.gmra.mrb[0].mxu0 %v1005
  %v1072 = vpop.f32.mrb[0].mxu0
  %v1073 = vadd.f32 0.0, %v1072
  %v1074 = vpop.f32.mrb[0].mxu0
  %1075 = vdwg.mxu0
  %v1076 = vmul.f32 %v1073, 0.001953125
  %v1077 = vlaneseq
  %v1078 = vshrl.u32 %v1077, 7
  %v1079 = vsub.s32 0, %v1078
  %v1080 = vrot.slane %v1076, %v1079
  %v1081 = vsub.f32 %v991, %v1080
  %v1082 = vsub.f32 %v992, %v1080
  %v1083 = vsub.f32 %v993, %v1080
  %v1084 = vsub.f32 %v994, %v1080
  %v1085 = vmul.f32 %v1081, %v1081
  %v1086 = vmul.f32 %v1082, %v1082
  %v1087 = vmul.f32 %v1083, %v1083
  %v1088 = vmul.f32 %v1084, %v1084
  %v1089 = vadd.f32 %v1085, %v1086
  %v1090 = vadd.f32 %v1089, %v1087
  %v1091 = vadd.f32 %v1090, %v1088
  %v1092 = vrot.slane %v1091, 4
  %v1093 = vadd.f32 %v1091, %v1092
  %v1094 = vrot.slane %v1093, 2
  %v1095 = vadd.f32 %v1093, %v1094
  %v1096 = vrot.slane %v1095, 1
  %v1097 = vadd.f32 %v1095, %v1096
  %1098 = vmatprep.subr.mxu0 0.0
  %1099 = vmatpush1.msra.mxu0 %v29
  %1100 = vmatprep.subr.mxu0 0.0
  %1101 = vmatpush1.msra.mxu0 %v30
  %1102 = vmatprep.subr.mxu0 0.0
  %1103 = vmatpush1.msra.mxu0 %v31
  %1104 = vmatprep.subr.mxu0 0.0
  %1105 = vmatpush1.msra.mxu0 %v32
  %1106 = vmatprep.subr.mxu0 0.0
  %1107 = vmatpush1.msra.mxu0 %v33
  %1108 = vmatprep.subr.mxu0 0.0
  %1109 = vmatpush1.msra.mxu0 %v34
  %1110 = vmatprep.subr.mxu0 0.0
  %1111 = vmatpush1.msra.mxu0 %v35
  %1112 = vmatprep.subr.mxu0 0.0
  %1113 = vmatpush1.msra.mxu0 %v36
  %1114 = vmatprep.subr.mxu0 0.0
  %1115 = vmatpush1.msra.mxu0 %v37
  %1116 = vmatprep.subr.mxu0 0.0
  %1117 = vmatpush1.msra.mxu0 %v38
  %1118 = vmatprep.subr.mxu0 0.0
  %1119 = vmatpush1.msra.mxu0 %v39
  %1120 = vmatprep.subr.mxu0 0.0
  %1121 = vmatpush1.msra.mxu0 %v40
  %1122 = vmatprep.subr.mxu0 0.0
  %1123 = vmatpush1.msra.mxu0 %v41
  %1124 = vmatprep.subr.mxu0 0.0
  %1125 = vmatpush1.msra.mxu0 %v42
  %1126 = vmatprep.subr.mxu0 0.0
  %1127 = vmatpush1.msra.mxu0 %v43
  %1128 = vmatprep.subr.mxu0 0.0
  %1129 = vmatpush1.msra.mxu0 %v44
  %1130 = vmatprep.subr.mxu0 0.0
  %1131 = vmatpush1.msra.mxu0 0.0
  %1132 = vmatprep.subr.mxu0 0.0
  %1133 = vmatpush1.msra.mxu0 0.0
  %1134 = vmatprep.subr.mxu0 0.0
  %1135 = vmatpush1.msra.mxu0 0.0
  %1136 = vmatprep.subr.mxu0 0.0
  %1137 = vmatpush1.msra.mxu0 0.0
  %1138 = vmatprep.subr.mxu0 0.0
  %1139 = vmatpush1.msra.mxu0 0.0
  %1140 = vmatprep.subr.mxu0 0.0
  %1141 = vmatpush1.msra.mxu0 0.0
  %1142 = vmatprep.subr.mxu0 0.0
  %1143 = vmatpush1.msra.mxu0 0.0
  %1144 = vmatprep.subr.mxu0 0.0
  %1145 = vmatpush1.msra.mxu0 0.0
  %1146 = vmatprep.subr.mxu0 0.0
  %1147 = vmatpush1.msra.mxu0 0.0
  %1148 = vmatprep.subr.mxu0 0.0
  %1149 = vmatpush1.msra.mxu0 0.0
  %1150 = vmatprep.subr.mxu0 0.0
  %1151 = vmatpush1.msra.mxu0 0.0
  %1152 = vmatprep.subr.mxu0 0.0
  %1153 = vmatpush1.msra.mxu0 0.0
  %1154 = vmatprep.subr.mxu0 0.0
  %1155 = vmatpush1.msra.mxu0 0.0
  %1156 = vmatprep.subr.mxu0 0.0
  %1157 = vmatpush1.msra.mxu0 0.0
  %1158 = vmatprep.subr.mxu0 0.0
  %1159 = vmatpush1.msra.mxu0 0.0
  %1160 = vmatprep.subr.mxu0 0.0
  %1161 = vmatpush1.msra.mxu0 0.0
  %1162 = vmatprep.mubr.f32.mxu0 0.0
  %1163 = vmatmul.mubr.f32.gmra.mrb[0].mxu0 %v1097
  %v1164 = vpop.f32.mrb[0].mxu0
  %v1165 = vadd.f32 0.0, %v1164
  %v1166 = vpop.f32.mrb[0].mxu0
  %1167 = vdwg.mxu0
  %v1168 = vmul.f32 %v1165, 0.001953125
  %v1169 = vadd.f32 %v1168, 1e-05
  %v1170 = vrsqrt.pop %v1169
  %v1171 = vmul.f32 %v995, %v1170
  %v1173 = vlaneseq
  %v1174 = vshrl.u32 %v1173, 7
  %v1175 = vsub.s32 0, %v1174
  %v1176 = vrot.slane %v1171, %v1175
  %v1178 = vmul.f32 %v1081, %v1176
  %v1179 = vmul.f32 %v1082, %v1176
  %v1180 = vmul.f32 %v1083, %v1176
  %v1181 = vmul.f32 %v1084, %v1176
  %v1183 = vlaneseq
  %v1184 = vshrl.u32 %v1183, 7
  %v1185 = vsub.s32 0, %v1184
  %v1186 = vrot.slane %v996, %v1185
  %v1188 = vadd.f32 %v1178, %v1186
  %v1189 = vadd.f32 %v1179, %v1186
  %v1190 = vadd.f32 %v1180, %v1186
  %v1191 = vadd.f32 %v1181, %v1186
  %v1192 = vmax.f32 %v1188, 0.0
  %v1193 = vmax.f32 %v1189, 0.0
  %v1194 = vmax.f32 %v1190, 0.0
  %v1195 = vmax.f32 %v1191, 0.0
  %1196 = vst [vmem:[%s8] sm:$0xff] %v1192
  %1197 = vst [vmem:[%s8 + $0x8] sm:$0xff] %v1193
  %1198 = vst [vmem:[%s8 + $0x10] sm:$0xff] %v1194
  %1199 = vst [vmem:[%s8 + $0x18] sm:$0xff] %v1195
  // Predicated region
  $region34: #{forward.1} parent=0 // pred_check
    _
  $region35: #{forward.1} parent=0 // pred_check_branch
    %1201 = sbr.rel (0) target = $region37
  $region36: #{forward.1} parent=0 // pred_region
    _
  $region37: #{forward.1} parent=0 // pred_fallthru
    _
  // Predicated region
  $region38: #{forward.1} parent=0 // pred_check
    _
  $region39: #{forward.1} parent=0 // pred_check_branch
    %1203 = sbr.rel (0) target = $region41
  $region40: #{forward.1} parent=0 // pred_region
    _
  $region41: #{forward.1} parent=0 // pred_fallthru
    _

</llo_original>
